<compile_context>
chip_gen: v7x
topology: tpu7x:2x2x1
jax: 0.10.0
libtpu: 0.0.40
codegen_flags: <defaults>
</compile_context>

<pallas_src>
import functools

import jax
import jax.numpy as jnp
from jax.experimental import pallas as pl
from jax.experimental.pallas import tpu as pltpu


def _bart_cross_attn_kernel(
    hs_ref,      # (1, Tq, E)      decoder hidden states tile (mxu dtype)
    enc_ref,     # (1, S,  E)      encoder hidden states (full src) for batch b
    mask_ref,    # (1, 1, Tm, S)   additive attention mask (Tm == Tq or 1)
    lhm_ref,     # (1, E)          layer head mask expanded per feature, f32
    wq_ref, bq_ref,                # (E, E) pre-transposed (in,out), (1, E) f32
    wk_ref, bk_ref,
    wv_ref, bv_ref,
    wo_ref, bo_ref,
    out_ref,     # (1, Tq, E)
    k_sc,        # (H, hd, S)      K cache, lane-dense S (compute dtype)
    v_sc,        # (H, S, hd)      V cache (pre-scaled by layer head mask)
    q_sc,        # (H, Tq, hd)     Q staged head-major for head-group slicing
    ctx_sc,      # (H, Tq, hd)     per-head context accumulator
    *,
    num_heads: int,
    head_block: int,
    scaling: float,
):
    cdt = k_sc.dtype                       # MXU operand dtype (bf16 by default)
    tq = hs_ref.shape[1]
    embed_dim = hs_ref.shape[2]
    head_dim = embed_dim // num_heads
    src = k_sc.shape[2]

    # ---- K/V projection: once per batch element (first tgt tile), cached ----
    @pl.when(pl.program_id(1) == 0)
    def _():
        enc = enc_ref[0]                                              # (S, E) cdt
        k = jnp.dot(enc, wk_ref[...], preferred_element_type=jnp.float32) + bk_ref[0]
        v = jnp.dot(enc, wv_ref[...], preferred_element_type=jnp.float32) + bv_ref[0]
        v = v * lhm_ref[...]          # fold layer head mask into V (per-head scalar)
        # K stored (H, hd, S): 2-D transpose then a free leading-dim split.
        k_sc[...] = k.astype(cdt).T.reshape(num_heads, head_dim, src)
        v_sc[...] = jnp.transpose(
            v.astype(cdt).reshape(src, num_heads, head_dim), (1, 0, 2))

    # ---- Q projection for this tgt tile (scaling applied as in the module) --
    hs = hs_ref[0]                                                    # (Tq, E) cdt
    q = jnp.dot(hs, wq_ref[...], preferred_element_type=jnp.float32) + bq_ref[0]
    q = (q * scaling).astype(cdt)
    q_sc[...] = jnp.transpose(q.reshape(tq, num_heads, head_dim), (1, 0, 2))

    mask2d = mask_ref[0, 0].astype(jnp.float32)                       # (Tm, S)

    # ---- head-group attention core (softmax math in f32, deferred norm) ----
    def head_group(g, carry):
        h0 = pl.multiple_of(g * head_block, head_block)
        qg = q_sc[pl.ds(h0, head_block)]                              # (Hg, Tq, hd)
        kg = k_sc[pl.ds(h0, head_block)]                              # (Hg, hd, S)
        vg = v_sc[pl.ds(h0, head_block)]                              # (Hg, S, hd)

        s = jnp.einsum("htd,hds->hts", qg, kg,
                       preferred_element_type=jnp.float32)            # (Hg, Tq, S)
        s = s + mask2d[None]                      # broadcast over heads (and tgt)
        s = s - jnp.max(s, axis=-1, keepdims=True)
        p = jnp.exp(s)                                                # unnormalized
        denom = jnp.sum(p, axis=-1, keepdims=True)                    # (Hg, Tq, 1)

        ctx = jnp.einsum("hts,hsd->htd", p.astype(cdt), vg,
                         preferred_element_type=jnp.float32)          # (Hg, Tq, hd)
        ctx = ctx * pl.reciprocal(denom, approx=True)   # deferred norm (EUP slot)
        ctx_sc[pl.ds(h0, head_block)] = ctx.astype(cdt)
        return carry

    jax.lax.fori_loop(0, num_heads // head_block, head_group, 0, unroll=True)

    # ---- output projection -------------------------------------------------
    ctx = jnp.transpose(ctx_sc[...], (1, 0, 2)).reshape(tq, embed_dim)
    out = jnp.dot(ctx, wo_ref[...], preferred_element_type=jnp.float32) + bo_ref[0]
    out_ref[0] = out.astype(out_ref.dtype)


def _default_tiling():
    """(block_tgt, vmem_limit_bytes) adapted to the chip's VMEM capacity."""
    vmem_cap = 128 * 1024 * 1024
    try:
        info = pltpu.get_tpu_info()
        vmem_cap = int(getattr(info, "vmem_capacity_bytes", vmem_cap))
    except Exception:
        pass
    if vmem_cap <= 64 * 1024 * 1024:          # v7x: 64 MiB per TensorCore
        return 128, 48 * 1024 * 1024
    return 256, 64 * 1024 * 1024              # v5e / v6e: 128 MiB


def bart_cross_attention(
    hidden_states,            # (bsz, tgt, E)
    encoder_states,           # (bsz, src, E)
    attention_mask,           # (bsz, 1, tgt, src) | (bsz, 1, 1, src) | (bsz, src) | None
    layer_head_mask,          # (num_heads,) | None
    params,                   # dict: wq,bq,wk,bk,wv,bv,wo,bo (PyTorch Linear layout)
    num_heads: int,
    *,
    mxu_dtype=jnp.bfloat16,   # MXU operand dtype; accumulation & softmax stay f32
    block_tgt: int = None,    # tgt tile; default adapts to VMEM capacity
    head_block: int = None,   # heads per inner iteration; bounds f32 scores size
    vmem_limit_bytes: int = None,
):
    bsz, tgt_len, embed_dim = hidden_states.shape
    _, src_len, _ = encoder_states.shape
    head_dim = embed_dim // num_heads
    assert head_dim * num_heads == embed_dim
    scaling = float(head_dim) ** -0.5

    default_bt, default_vmem = _default_tiling()
    if block_tgt is None:
        block_tgt = default_bt
    if vmem_limit_bytes is None:
        vmem_limit_bytes = default_vmem

    # Pre-transpose (out,in)->(in,out) and pre-cast weights once in the wrapper
    # so the kernel feeds the MXU directly (no in-kernel .T of E x E tiles).
    wq = params["wq"].T.astype(mxu_dtype)
    wk = params["wk"].T.astype(mxu_dtype)
    wv = params["wv"].T.astype(mxu_dtype)
    wo = params["wo"].T.astype(mxu_dtype)
    bq = params["bq"].reshape(1, embed_dim).astype(jnp.float32)
    bk = params["bk"].reshape(1, embed_dim).astype(jnp.float32)
    bv = params["bv"].reshape(1, embed_dim).astype(jnp.float32)
    bo = params["bo"].reshape(1, embed_dim).astype(jnp.float32)

    # Layer head mask folded into V: expand per-head scalar to per-feature row.
    if layer_head_mask is None:
        layer_head_mask = jnp.ones((num_heads,), jnp.float32)
    lhm = jnp.repeat(layer_head_mask.astype(jnp.float32),
                     head_dim).reshape(1, embed_dim)

    # Accept the module's full additive mask or a compact key-padding row.
    if attention_mask is None:
        attention_mask = jnp.zeros((bsz, 1, 1, src_len), jnp.float32)
    if attention_mask.ndim == 2:
        attention_mask = attention_mask[:, None, None, :]
    mask = attention_mask.astype(mxu_dtype)       # {0,-1e9}-style masks are bf16-safe
    assert mask.shape[0] == bsz and mask.shape[1] == 1 and mask.shape[3] == src_len
    mask_rows = mask.shape[2]
    assert mask_rows in (1, tgt_len)

    # tgt tiling: blocks must be (8,128)-legal (second-minor multiple of 8 or full).
    block_tgt = min(block_tgt, tgt_len)
    if block_tgt != tgt_len and block_tgt % 8 != 0:
        block_tgt = tgt_len
    n_tgt_blocks = pl.cdiv(tgt_len, block_tgt)
    mask_block_rows = block_tgt if mask_rows != 1 else 1

    # Head grouping: bound the f32 (Hg, block_tgt, S) scores intermediate.
    if head_block is None:
        scores_budget = 16 * 1024 * 1024
        fitting = [d for d in range(1, num_heads + 1)
                   if num_heads % d == 0
                   and d * block_tgt * src_len * 4 <= scores_budget]
        head_block = max(fitting) if fitting else 1
    assert num_heads % head_block == 0

    # Pre-cast the two large streamed operands (halves HBM traffic / VMEM tiles).
    hs_c = hidden_states.astype(mxu_dtype)
    enc_c = encoder_states.astype(mxu_dtype)

    def mask_index_map(b, t):
        return (b, 0, t if mask_rows != 1 else 0, 0)

    # Grid-invariant operands: un-blocked, VMEM-resident for the whole kernel
    # (single copy -> no double-buffering of the four E x E weights).
    vmem_resident = pl.BlockSpec(memory_space=pltpu.MemorySpace.VMEM)

    kernel = functools.partial(
        _bart_cross_attn_kernel, num_heads=num_heads,
        head_block=head_block, scaling=scaling)

    itemsize = jnp.dtype(mxu_dtype).itemsize
    flops = bsz * (4 * tgt_len * embed_dim * embed_dim
                   + 4 * src_len * embed_dim * embed_dim
                   + 4 * num_heads * tgt_len * src_len * head_dim)
    bytes_accessed = (hs_c.size * itemsize
                      + enc_c.size * itemsize
                      + mask.size * mask.dtype.itemsize
                      + 4 * embed_dim * embed_dim * itemsize
                      + bsz * tgt_len * embed_dim
                      * jnp.dtype(hidden_states.dtype).itemsize)
    cost = pl.CostEstimate(
        flops=int(flops),
        transcendentals=int(bsz * num_heads * tgt_len * src_len),
        bytes_accessed=int(bytes_accessed))

    return pl.pallas_call(
        kernel,
        out_shape=jax.ShapeDtypeStruct((bsz, tgt_len, embed_dim),
                                       hidden_states.dtype),
        grid=(bsz, n_tgt_blocks),
        in_specs=[
            pl.BlockSpec((1, block_tgt, embed_dim), lambda b, t: (b, t, 0)),
            pl.BlockSpec((1, src_len, embed_dim), lambda b, t: (b, 0, 0)),
            pl.BlockSpec((1, 1, mask_block_rows, src_len), mask_index_map),
            vmem_resident,                       # layer head mask (1, E)
            vmem_resident, vmem_resident,        # wq, bq
            vmem_resident, vmem_resident,        # wk, bk
            vmem_resident, vmem_resident,        # wv, bv
            vmem_resident, vmem_resident,        # wo, bo
        ],
        out_specs=pl.BlockSpec((1, block_tgt, embed_dim), lambda b, t: (b, t, 0)),
        scratch_shapes=[
            pltpu.VMEM((num_heads, head_dim, src_len), mxu_dtype),   # K cache (lane-dense S)
            pltpu.VMEM((num_heads, src_len, head_dim), mxu_dtype),   # V cache (lhm-scaled)
            pltpu.VMEM((num_heads, block_tgt, head_dim), mxu_dtype),  # Q staged head-major
            pltpu.VMEM((num_heads, block_tgt, head_dim), mxu_dtype),  # ctx accumulator
        ],
        compiler_params=pltpu.CompilerParams(
            dimension_semantics=("parallel", "arbitrary"),
            vmem_limit_bytes=vmem_limit_bytes,
        ),
        cost_estimate=cost,
    )(hs_c, enc_c, mask, lhm, wq, bq, wk, bk, wv, bv, wo, bo)


def _reference(hidden_states, encoder_states, attention_mask,
               layer_head_mask, params, num_heads):
    """Pure-JAX replica of the PyTorch forward (f32) for verification."""
    bsz, tgt_len, E = hidden_states.shape
    _, src_len, _ = encoder_states.shape
    hd = E // num_heads
    scaling = float(hd) ** -0.5

    def lin(x, w, b):
        return x @ w.T + b

    def shape(t, sl):
        return t.reshape(bsz, sl, num_heads, hd).transpose(0, 2, 1, 3)

    q = shape(lin(hidden_states, params["wq"], params["bq"]) * scaling, tgt_len)
    k = shape(lin(encoder_states, params["wk"], params["bk"]), src_len)
    v = shape(lin(encoder_states, params["wv"], params["bv"]), src_len)

    w = jnp.einsum("bhqd,bhkd->bhqk", q, k)
    w = w + attention_mask                 # broadcasts full or key-padding masks
    w = jax.nn.softmax(w, axis=-1)
    w = layer_head_mask.reshape(1, -1, 1, 1) * w
    o = jnp.einsum("bhqk,bhkd->bhqd", w, v)
    o = o.transpose(0, 2, 1, 3).reshape(bsz, tgt_len, E)
    return lin(o, params["wo"], params["bo"])


if __name__ == "__main__":
    embed_dim, num_heads = 32, 4
    bsz, tgt_len, src_len = 2, 16, 16

    key = jax.random.PRNGKey(0)
    ks = jax.random.split(key, 12)
    init = lambda k, shape, s=0.05: (s * jax.random.normal(k, shape)).astype(jnp.float32)

    params = {
        "wq": init(ks[0], (embed_dim, embed_dim)),
        "bq": init(ks[1], (embed_dim,)),
        "wk": init(ks[2], (embed_dim, embed_dim)),
        "bk": init(ks[3], (embed_dim,)),
        "wv": init(ks[4], (embed_dim, embed_dim)),
        "bv": init(ks[5], (embed_dim,)),
        "wo": init(ks[6], (embed_dim, embed_dim)),
        "bo": init(ks[7], (embed_dim,)),
    }

    hidden_states = jax.random.normal(ks[8], (bsz, tgt_len, embed_dim),
                                      dtype=jnp.float32)
    encoder_states = jax.random.normal(ks[9], (bsz, src_len, embed_dim),
                                       dtype=jnp.float32)
    attention_mask = 0.5 * jax.random.normal(
        ks[10], (bsz, 1, tgt_len, src_len), dtype=jnp.float32)
    layer_head_mask = jax.random.uniform(
        ks[11], (num_heads,), dtype=jnp.float32)

    ref = _reference(hidden_states, encoder_states, attention_mask,
                     layer_head_mask, params, num_heads)

    # 1) f32 MXU path (tight check; approx reciprocal -> 1e-3 tolerance).
    out_f32 = bart_cross_attention(hidden_states, encoder_states, attention_mask,
                                   layer_head_mask, params, num_heads,
                                   mxu_dtype=jnp.float32)
    out_f32 = jax.block_until_ready(out_f32)
    assert out_f32.shape == (bsz, tgt_len, embed_dim)
    err = float(jnp.max(jnp.abs(out_f32 - ref)))
    assert err < 1e-3, f"f32 path max err {err}"

    # 2) default bf16-MXU path (f32 accumulation/softmax; looser tolerance).
    out_bf16 = bart_cross_attention(hidden_states, encoder_states, attention_mask,
                                    layer_head_mask, params, num_heads)
    out_bf16 = jax.block_until_ready(out_bf16)
    err = float(jnp.max(jnp.abs(out_bf16 - ref)))
    assert err < 2e-2, f"bf16 path max err {err}"

    # 3) exercise tgt tiling (block_tgt=8) + the head-group loop (head_block=2).
    out_tiled = bart_cross_attention(hidden_states, encoder_states, attention_mask,
                                     layer_head_mask, params, num_heads,
                                     mxu_dtype=jnp.float32,
                                     block_tgt=8, head_block=2)
    out_tiled = jax.block_until_ready(out_tiled)
    err = float(jnp.max(jnp.abs(out_tiled - ref)))
    assert err < 1e-3, f"tiled/head-group path max err {err}"

    # 4) compact key-padding mask (bsz, 1, 1, src) — preferred cross-attn form.
    valid = (jnp.arange(src_len)[None, :] <
             jnp.array([[src_len], [src_len // 2]])).astype(jnp.float32)
    pad_mask = (1.0 - valid)[:, None, None, :] * -1e9
    ref_pad = _reference(hidden_states, encoder_states, pad_mask,
                         layer_head_mask, params, num_heads)
    out_pad = bart_cross_attention(hidden_states, encoder_states, pad_mask,
                                   layer_head_mask, params, num_heads,
                                   mxu_dtype=jnp.float32)
    out_pad = jax.block_until_ready(out_pad)
    err = float(jnp.max(jnp.abs(out_pad - ref_pad)))
    assert err < 1e-3, f"padding-mask path max err {err}"

    print("KERNEL_OK")
</pallas_src>

<mosaic_0001>
module attributes {stable_mosaic.version = 11 : i64} {
  func.func @_bart_cross_attn_kernel(%arg0: i32, %arg1: i32, %arg2: memref<1x16x32xf32, #tpu.memory_space<vmem>>, %arg3: memref<1x16x32xf32, #tpu.memory_space<vmem>>, %arg4: memref<1x1x16x16xf32, #tpu.memory_space<vmem>>, %arg5: memref<1x32xf32, #tpu.memory_space<vmem>>, %arg6: memref<32x32xf32, #tpu.memory_space<vmem>>, %arg7: memref<1x32xf32, #tpu.memory_space<vmem>>, %arg8: memref<32x32xf32, #tpu.memory_space<vmem>>, %arg9: memref<1x32xf32, #tpu.memory_space<vmem>>, %arg10: memref<32x32xf32, #tpu.memory_space<vmem>>, %arg11: memref<1x32xf32, #tpu.memory_space<vmem>>, %arg12: memref<32x32xf32, #tpu.memory_space<vmem>>, %arg13: memref<1x32xf32, #tpu.memory_space<vmem>>, %arg14: memref<1x16x32xf32, #tpu.memory_space<vmem>>, %arg15: memref<4x8x16xf32, #tpu.memory_space<vmem>>, %arg16: memref<4x16x8xf32, #tpu.memory_space<vmem>>, %arg17: memref<4x16x8xf32, #tpu.memory_space<vmem>>, %arg18: memref<4x16x8xf32, #tpu.memory_space<vmem>>) attributes {dimension_semantics = [#tpu.dimension_semantics<parallel>, #tpu.dimension_semantics<arbitrary>], iteration_bounds = array<i64: 2, 1>, scalar_prefetch = 0 : i64, scratch_operands = 4 : i64, tpu.core_type = #tpu.core_type<tc>, window_params = [{transform_indices = @transform_0, window_bounds = array<i64: 1, 16, 32>}, {transform_indices = @transform_1, window_bounds = array<i64: 1, 16, 32>}, {transform_indices = @transform_2, window_bounds = array<i64: 1, 1, 16, 16>}, {pipeline_mode = #tpu.pipeline_mode<synchronous>, transform_indices = @transform_3, window_bounds = array<i64: 1, 32>}, {pipeline_mode = #tpu.pipeline_mode<synchronous>, transform_indices = @transform_4, window_bounds = array<i64: 32, 32>}, {pipeline_mode = #tpu.pipeline_mode<synchronous>, transform_indices = @transform_5, window_bounds = array<i64: 1, 32>}, {pipeline_mode = #tpu.pipeline_mode<synchronous>, transform_indices = @transform_6, window_bounds = array<i64: 32, 32>}, {pipeline_mode = #tpu.pipeline_mode<synchronous>, transform_indices = @transform_7, window_bounds = array<i64: 1, 32>}, {pipeline_mode = #tpu.pipeline_mode<synchronous>, transform_indices = @transform_8, window_bounds = array<i64: 32, 32>}, {pipeline_mode = #tpu.pipeline_mode<synchronous>, transform_indices = @transform_9, window_bounds = array<i64: 1, 32>}, {pipeline_mode = #tpu.pipeline_mode<synchronous>, transform_indices = @transform_10, window_bounds = array<i64: 32, 32>}, {pipeline_mode = #tpu.pipeline_mode<synchronous>, transform_indices = @transform_11, window_bounds = array<i64: 1, 32>}, {transform_indices = @transform_12, window_bounds = array<i64: 1, 16, 32>}]} {
    %c0_i32 = arith.constant 0 : i32
    %0 = arith.cmpi eq, %arg1, %c0_i32 : i32
    %1 = arith.extui %0 : i1 to i32
    %c0_i32_0 = arith.constant 0 : i32
    %2 = arith.cmpi ne, %1, %c0_i32_0 : i32
    scf.if %2 {
      %c0_39 = arith.constant 0 : index
      %c0_40 = arith.constant 0 : index
      %c0_41 = arith.constant 0 : index
      %57 = vector.load %arg3[%c0_39, %c0_40, %c0_41] : memref<1x16x32xf32, #tpu.memory_space<vmem>>, vector<1x16x32xf32>
      %58 = vector.shape_cast %57 : vector<1x16x32xf32> to vector<16x32xf32>
      %c0_42 = arith.constant 0 : index
      %c0_43 = arith.constant 0 : index
      %59 = vector.load %arg8[%c0_42, %c0_43] : memref<32x32xf32, #tpu.memory_space<vmem>>, vector<32x32xf32>
      %cst_44 = arith.constant dense<0.000000e+00> : vector<16x32xf32>
      %60 = tpu.matmul %58, %59, %cst_44 {dimension_numbers = #tpu.dot_dimension_numbers<[1], [0], [0], [1], [0, 0, 1, 1], [], []>} : vector<16x32xf32>, vector<32x32xf32>, vector<16x32xf32> -> vector<16x32xf32>
      %c0_45 = arith.constant 0 : index
      %c0_46 = arith.constant 0 : index
      %61 = vector.load %arg9[%c0_45, %c0_46] : memref<1x32xf32, #tpu.memory_space<vmem>>, vector<1x32xf32>
      %62 = vector.shape_cast %61 : vector<1x32xf32> to vector<32xf32>
      %63 = vector.shape_cast %62 : vector<32xf32> to vector<1x32xf32>
      %64 = vector.broadcast %63 : vector<1x32xf32> to vector<16x32xf32>
      %65 = arith.addf %60, %64 : vector<16x32xf32>
      %c0_47 = arith.constant 0 : index
      %c0_48 = arith.constant 0 : index
      %66 = vector.load %arg10[%c0_47, %c0_48] : memref<32x32xf32, #tpu.memory_space<vmem>>, vector<32x32xf32>
      %cst_49 = arith.constant dense<0.000000e+00> : vector<16x32xf32>
      %67 = tpu.matmul %58, %66, %cst_49 {dimension_numbers = #tpu.dot_dimension_numbers<[1], [0], [0], [1], [0, 0, 1, 1], [], []>} : vector<16x32xf32>, vector<32x32xf32>, vector<16x32xf32> -> vector<16x32xf32>
      %c0_50 = arith.constant 0 : index
      %c0_51 = arith.constant 0 : index
      %68 = vector.load %arg11[%c0_50, %c0_51] : memref<1x32xf32, #tpu.memory_space<vmem>>, vector<1x32xf32>
      %69 = vector.shape_cast %68 : vector<1x32xf32> to vector<32xf32>
      %70 = vector.shape_cast %69 : vector<32xf32> to vector<1x32xf32>
      %71 = vector.broadcast %70 : vector<1x32xf32> to vector<16x32xf32>
      %72 = arith.addf %67, %71 : vector<16x32xf32>
      %c0_52 = arith.constant 0 : index
      %c0_53 = arith.constant 0 : index
      %73 = vector.load %arg5[%c0_52, %c0_53] : memref<1x32xf32, #tpu.memory_space<vmem>>, vector<1x32xf32>
      %74 = vector.broadcast %73 : vector<1x32xf32> to vector<16x32xf32>
      %75 = arith.mulf %72, %74 : vector<16x32xf32>
      %76 = tpu.transpose %65, [1, 0] : vector<16x32xf32> -> vector<32x16xf32>
      %77 = vector.shape_cast %76 : vector<32x16xf32> to vector<4x8x16xf32>
      %c0_54 = arith.constant 0 : index
      %c0_55 = arith.constant 0 : index
      %c0_56 = arith.constant 0 : index
      %78 = vector.load %arg15[%c0_54, %c0_55, %c0_56] : memref<4x8x16xf32, #tpu.memory_space<vmem>>, vector<4x8x16xf32>
      tpu.vector_store %arg15[%c0_54, %c0_55, %c0_56], %77 {strides = array<i32>} : memref<4x8x16xf32, #tpu.memory_space<vmem>>, vector<4x8x16xf32>,
      %79 = vector.shape_cast %75 : vector<16x32xf32> to vector<16x4x8xf32>
      %80 = tpu.transpose %79, [1, 0, 2] : vector<16x4x8xf32> -> vector<4x16x8xf32>
      %c0_57 = arith.constant 0 : index
      %c0_58 = arith.constant 0 : index
      %c0_59 = arith.constant 0 : index
      %81 = vector.load %arg16[%c0_57, %c0_58, %c0_59] : memref<4x16x8xf32, #tpu.memory_space<vmem>>, vector<4x16x8xf32>
      tpu.vector_store %arg16[%c0_57, %c0_58, %c0_59], %80 {strides = array<i32>} : memref<4x16x8xf32, #tpu.memory_space<vmem>>, vector<4x16x8xf32>,
    } else {
    }
    %c0 = arith.constant 0 : index
    %c0_1 = arith.constant 0 : index
    %c0_2 = arith.constant 0 : index
    %3 = vector.load %arg2[%c0, %c0_1, %c0_2] : memref<1x16x32xf32, #tpu.memory_space<vmem>>, vector<1x16x32xf32>
    %4 = vector.shape_cast %3 : vector<1x16x32xf32> to vector<16x32xf32>
    %c0_3 = arith.constant 0 : index
    %c0_4 = arith.constant 0 : index
    %5 = vector.load %arg6[%c0_3, %c0_4] : memref<32x32xf32, #tpu.memory_space<vmem>>, vector<32x32xf32>
    %cst = arith.constant dense<0.000000e+00> : vector<16x32xf32>
    %6 = tpu.matmul %4, %5, %cst {dimension_numbers = #tpu.dot_dimension_numbers<[1], [0], [0], [1], [0, 0, 1, 1], [], []>} : vector<16x32xf32>, vector<32x32xf32>, vector<16x32xf32> -> vector<16x32xf32>
    %c0_5 = arith.constant 0 : index
    %c0_6 = arith.constant 0 : index
    %7 = vector.load %arg7[%c0_5, %c0_6] : memref<1x32xf32, #tpu.memory_space<vmem>>, vector<1x32xf32>
    %8 = vector.shape_cast %7 : vector<1x32xf32> to vector<32xf32>
    %9 = vector.shape_cast %8 : vector<32xf32> to vector<1x32xf32>
    %10 = vector.broadcast %9 : vector<1x32xf32> to vector<16x32xf32>
    %11 = arith.addf %6, %10 : vector<16x32xf32>
    %cst_7 = arith.constant 0.353553385 : f32
    %12 = vector.broadcast %cst_7 : f32 to vector<16x32xf32>
    %13 = arith.mulf %11, %12 : vector<16x32xf32>
    %14 = vector.shape_cast %13 : vector<16x32xf32> to vector<16x4x8xf32>
    %15 = tpu.transpose %14, [1, 0, 2] : vector<16x4x8xf32> -> vector<4x16x8xf32>
    %c0_8 = arith.constant 0 : index
    %c0_9 = arith.constant 0 : index
    %c0_10 = arith.constant 0 : index
    %16 = vector.load %arg17[%c0_8, %c0_9, %c0_10] : memref<4x16x8xf32, #tpu.memory_space<vmem>>, vector<4x16x8xf32>
    tpu.vector_store %arg17[%c0_8, %c0_9, %c0_10], %15 {strides = array<i32>} : memref<4x16x8xf32, #tpu.memory_space<vmem>>, vector<4x16x8xf32>,
    %c0_11 = arith.constant 0 : index
    %c0_12 = arith.constant 0 : index
    %c0_13 = arith.constant 0 : index
    %c0_14 = arith.constant 0 : index
    %17 = vector.load %arg4[%c0_11, %c0_12, %c0_13, %c0_14] : memref<1x1x16x16xf32, #tpu.memory_space<vmem>>, vector<1x1x16x16xf32>
    %18 = vector.shape_cast %17 : vector<1x1x16x16xf32> to vector<16x16xf32>
    %c0_i32_15 = arith.constant 0 : i32
    %c4_i32 = arith.constant 4 : i32
    %19 = arith.muli %c0_i32_15, %c4_i32 : i32
    %20 = tpu.assume_multiple %19, 4 : i32
    %21 = arith.index_cast %20 : i32 to index
    %c0_16 = arith.constant 0 : index
    %c0_17 = arith.constant 0 : index
    %22 = vector.load %arg17[%21, %c0_16, %c0_17] : memref<4x16x8xf32, #tpu.memory_space<vmem>>, vector<4x16x8xf32>
    %23 = arith.index_cast %20 : i32 to index
    %c0_18 = arith.constant 0 : index
    %c0_19 = arith.constant 0 : index
    %24 = vector.load %arg15[%23, %c0_18, %c0_19] : memref<4x8x16xf32, #tpu.memory_space<vmem>>, vector<4x8x16xf32>
    %25 = arith.index_cast %20 : i32 to index
    %c0_20 = arith.constant 0 : index
    %c0_21 = arith.constant 0 : index
    %26 = vector.load %arg16[%25, %c0_20, %c0_21] : memref<4x16x8xf32, #tpu.memory_space<vmem>>, vector<4x16x8xf32>
    "tpu.trace_start"() <{level = 10 : i32, message = "htd,hds->hts"}> : () -> ()
    %cst_22 = arith.constant dense<0.000000e+00> : vector<4x16x16xf32>
    %27 = tpu.matmul %22, %24, %cst_22 {dimension_numbers = #tpu.dot_dimension_numbers<[2], [1], [1], [2], [0, 0, 0, 1, 1, 2], [0], [0]>} : vector<4x16x8xf32>, vector<4x8x16xf32>, vector<4x16x16xf32> -> vector<4x16x16xf32>
    "tpu.trace_stop"() : () -> ()
    %28 = vector.shape_cast %18 : vector<16x16xf32> to vector<1x16x16xf32>
    %29 = vector.broadcast %28 : vector<1x16x16xf32> to vector<4x16x16xf32>
    %30 = arith.addf %27, %29 : vector<4x16x16xf32>
    %cst_23 = arith.constant dense<0xFF800000> : vector<4x16xf32>
    %31 = vector.multi_reduction <maximumf>, %30, %cst_23 [2] : vector<4x16x16xf32> to vector<4x16xf32>
    %32 = vector.shape_cast %31 : vector<4x16xf32> to vector<4x16x1xf32>
    %33 = vector.broadcast %32 : vector<4x16x1xf32> to vector<4x16x16xf32>
    %34 = arith.subf %30, %33 : vector<4x16x16xf32>
    %35 = math.exp %34 : vector<4x16x16xf32>
    %cst_24 = arith.constant dense<0.000000e+00> : vector<4x16xf32>
    %36 = vector.multi_reduction <add>, %35, %cst_24 [2] : vector<4x16x16xf32> to vector<4x16xf32>
    %37 = vector.shape_cast %36 : vector<4x16xf32> to vector<4x16x1xf32>
    "tpu.trace_start"() <{level = 10 : i32, message = "hts,hsd->htd"}> : () -> ()
    %cst_25 = arith.constant dense<0.000000e+00> : vector<4x16x8xf32>
    %38 = tpu.matmul %35, %26, %cst_25 {dimension_numbers = #tpu.dot_dimension_numbers<[2], [1], [1], [2], [0, 0, 0, 1, 1, 2], [0], [0]>} : vector<4x16x16xf32>, vector<4x16x8xf32>, vector<4x16x8xf32> -> vector<4x16x8xf32>
    "tpu.trace_stop"() : () -> ()
    %39 = tpu.reciprocal %37 {approx = true} : vector<4x16x1xf32> -> vector<4x16x1xf32>
    %40 = vector.broadcast %39 : vector<4x16x1xf32> to vector<4x16x8xf32>
    %41 = arith.mulf %38, %40 : vector<4x16x8xf32>
    %42 = arith.index_cast %20 : i32 to index
    %c0_26 = arith.constant 0 : index
    %c0_27 = arith.constant 0 : index
    %43 = vector.load %arg18[%42, %c0_26, %c0_27] : memref<4x16x8xf32, #tpu.memory_space<vmem>>, vector<4x16x8xf32>
    tpu.vector_store %arg18[%42, %c0_26, %c0_27], %41 {strides = array<i32>} : memref<4x16x8xf32, #tpu.memory_space<vmem>>, vector<4x16x8xf32>,
    %c1_i32 = arith.constant 1 : i32
    %c0_28 = arith.constant 0 : index
    %c0_29 = arith.constant 0 : index
    %c0_30 = arith.constant 0 : index
    %44 = vector.load %arg18[%c0_28, %c0_29, %c0_30] : memref<4x16x8xf32, #tpu.memory_space<vmem>>, vector<4x16x8xf32>
    %45 = tpu.transpose %44, [1, 0, 2] : vector<4x16x8xf32> -> vector<16x4x8xf32>
    %46 = vector.shape_cast %45 : vector<16x4x8xf32> to vector<16x32xf32>
    %c0_31 = arith.constant 0 : index
    %c0_32 = arith.constant 0 : index
    %47 = vector.load %arg12[%c0_31, %c0_32] : memref<32x32xf32, #tpu.memory_space<vmem>>, vector<32x32xf32>
    %cst_33 = arith.constant dense<0.000000e+00> : vector<16x32xf32>
    %48 = tpu.matmul %46, %47, %cst_33 {dimension_numbers = #tpu.dot_dimension_numbers<[1], [0], [0], [1], [0, 0, 1, 1], [], []>} : vector<16x32xf32>, vector<32x32xf32>, vector<16x32xf32> -> vector<16x32xf32>
    %c0_34 = arith.constant 0 : index
    %c0_35 = arith.constant 0 : index
    %49 = vector.load %arg13[%c0_34, %c0_35] : memref<1x32xf32, #tpu.memory_space<vmem>>, vector<1x32xf32>
    %50 = vector.shape_cast %49 : vector<1x32xf32> to vector<32xf32>
    %51 = vector.shape_cast %50 : vector<32xf32> to vector<1x32xf32>
    %52 = vector.broadcast %51 : vector<1x32xf32> to vector<16x32xf32>
    %53 = arith.addf %48, %52 : vector<16x32xf32>
    %c0_36 = arith.constant 0 : index
    %c0_37 = arith.constant 0 : index
    %c0_38 = arith.constant 0 : index
    %54 = vector.load %arg14[%c0_36, %c0_37, %c0_38] : memref<1x16x32xf32, #tpu.memory_space<vmem>>, vector<1x16x32xf32>
    %55 = vector.shape_cast %54 : vector<1x16x32xf32> to vector<16x32xf32>
    %56 = vector.shape_cast %53 : vector<16x32xf32> to vector<1x16x32xf32>
    tpu.vector_store %arg14[%c0_36, %c0_37, %c0_38], %56 {strides = array<i32>} : memref<1x16x32xf32, #tpu.memory_space<vmem>>, vector<1x16x32xf32>,
    return
  }
  func.func @transform_0(%arg0: i32, %arg1: i32) -> (i32, i32, i32) {
    %c0_i32 = arith.constant 0 : i32
    %c0_i32_0 = arith.constant 0 : i32
    return %arg0, %arg1, %c0_i32 : i32, i32, i32
  }
  func.func @transform_1(%arg0: i32, %arg1: i32) -> (i32, i32, i32) {
    %c0_i32 = arith.constant 0 : i32
    %c0_i32_0 = arith.constant 0 : i32
    %c0_i32_1 = arith.constant 0 : i32
    return %arg0, %c0_i32, %c0_i32_0 : i32, i32, i32
  }
  func.func @transform_2(%arg0: i32, %arg1: i32) -> (i32, i32, i32, i32) {
    %c0_i32 = arith.constant 0 : i32
    %c0_i32_0 = arith.constant 0 : i32
    %c0_i32_1 = arith.constant 0 : i32
    return %arg0, %c0_i32, %arg1, %c0_i32_0 : i32, i32, i32, i32
  }
  func.func @transform_3(%arg0: i32, %arg1: i32) -> (i32, i32) {
    %c0_i32 = arith.constant 0 : i32
    %c0_i32_0 = arith.constant 0 : i32
    %c0_i32_1 = arith.constant 0 : i32
    return %c0_i32, %c0_i32_0 : i32, i32
  }
  func.func @transform_4(%arg0: i32, %arg1: i32) -> (i32, i32) {
    %c0_i32 = arith.constant 0 : i32
    %c0_i32_0 = arith.constant 0 : i32
    %c0_i32_1 = arith.constant 0 : i32
    return %c0_i32, %c0_i32_0 : i32, i32
  }
  func.func @transform_5(%arg0: i32, %arg1: i32) -> (i32, i32) {
    %c0_i32 = arith.constant 0 : i32
    %c0_i32_0 = arith.constant 0 : i32
    %c0_i32_1 = arith.constant 0 : i32
    return %c0_i32, %c0_i32_0 : i32, i32
  }
  func.func @transform_6(%arg0: i32, %arg1: i32) -> (i32, i32) {
    %c0_i32 = arith.constant 0 : i32
    %c0_i32_0 = arith.constant 0 : i32
    %c0_i32_1 = arith.constant 0 : i32
    return %c0_i32, %c0_i32_0 : i32, i32
  }
  func.func @transform_7(%arg0: i32, %arg1: i32) -> (i32, i32) {
    %c0_i32 = arith.constant 0 : i32
    %c0_i32_0 = arith.constant 0 : i32
    %c0_i32_1 = arith.constant 0 : i32
    return %c0_i32, %c0_i32_0 : i32, i32
  }
  func.func @transform_8(%arg0: i32, %arg1: i32) -> (i32, i32) {
    %c0_i32 = arith.constant 0 : i32
    %c0_i32_0 = arith.constant 0 : i32
    %c0_i32_1 = arith.constant 0 : i32
    return %c0_i32, %c0_i32_0 : i32, i32
  }
  func.func @transform_9(%arg0: i32, %arg1: i32) -> (i32, i32) {
    %c0_i32 = arith.constant 0 : i32
    %c0_i32_0 = arith.constant 0 : i32
    %c0_i32_1 = arith.constant 0 : i32
    return %c0_i32, %c0_i32_0 : i32, i32
  }
  func.func @transform_10(%arg0: i32, %arg1: i32) -> (i32, i32) {
    %c0_i32 = arith.constant 0 : i32
    %c0_i32_0 = arith.constant 0 : i32
    %c0_i32_1 = arith.constant 0 : i32
    return %c0_i32, %c0_i32_0 : i32, i32
  }
  func.func @transform_11(%arg0: i32, %arg1: i32) -> (i32, i32) {
    %c0_i32 = arith.constant 0 : i32
    %c0_i32_0 = arith.constant 0 : i32
    %c0_i32_1 = arith.constant 0 : i32
    return %c0_i32, %c0_i32_0 : i32, i32
  }
  func.func @transform_12(%arg0: i32, %arg1: i32) -> (i32, i32, i32) {
    %c0_i32 = arith.constant 0 : i32
    %c0_i32_0 = arith.constant 0 : i32
    return %arg0, %arg1, %c0_i32 : i32, i32, i32
  }
}

</mosaic_0001>

<llo_original>
// kernel: tpu_custom_call.1
$region0: #{tpu_custom_call.1}
  #allocation0 [shape = 'u32[]', space=smem, size = 0x4, offset = 0x4, fixed_abs, tag = 'smem constant byte address 0x4 - core index']
  #allocation1 [shape = 'u32[144,128]{1,0:T(1,128)}', space=vmem, size = 0x12000, scoped, tag = 'internal scratch']
  #allocation2 [shape = 'f32[4,8,16]{2,1,0:T(8,128)}', space=vmem, size = 0x4000, scoped, tag = 'scratch operand']
  #allocation3 [shape = 'f32[4,16,8]{2,1,0:T(8,128)}', space=vmem, size = 0x8000, scoped, tag = 'scratch operand']
  #allocation4 [shape = 'f32[4,16,8]{2,1,0:T(8,128)}', space=vmem, size = 0x8000, scoped, tag = 'scratch operand']
  #allocation5 [shape = 'f32[4,16,8]{2,1,0:T(8,128)}', space=vmem, size = 0x8000, scoped, tag = 'scratch operand']
  %s0 = inlined_call_operand.hbm [shape: f32[2,16,32], index: 0, kind: input, shape index: {}]
  %s1 = inlined_call_operand.hbm [shape: f32[2,16,32], index: 1, kind: input, shape index: {}]
  %s2 = inlined_call_operand.hbm [shape: f32[2,1,16,16], index: 2, kind: input, shape index: {}]
  %s3 = inlined_call_operand.hbm [shape: f32[1,32], index: 3, kind: input, shape index: {}]
  %s4 = inlined_call_operand.hbm [shape: f32[32,32], index: 4, kind: input, shape index: {}]
  %s5 = inlined_call_operand.hbm [shape: f32[1,32], index: 5, kind: input, shape index: {}]
  %s6 = inlined_call_operand.hbm [shape: f32[32,32], index: 6, kind: input, shape index: {}]
  %s7 = inlined_call_operand.hbm [shape: f32[1,32], index: 7, kind: input, shape index: {}]
  %s8 = inlined_call_operand.hbm [shape: f32[32,32], index: 8, kind: input, shape index: {}]
  %s9 = inlined_call_operand.hbm [shape: f32[1,32], index: 9, kind: input, shape index: {}]
  %s10 = inlined_call_operand.hbm [shape: f32[32,32], index: 10, kind: input, shape index: {}]
  %s11 = inlined_call_operand.hbm [shape: f32[1,32], index: 11, kind: input, shape index: {}]
  %s12 = inlined_call_operand.hbm [shape: f32[2,16,32], index: 12, kind: output, shape index: {}]
  %s13 = sld [smem:[#allocation0]]
  $region133: #{tpu_custom_call.1} parent=0
    _
  %s15 = ssub.s32 1, %s13
  %s16 = scalar_select 0, %s15, %s13
  $region1: #{tpu_custom_call.1} parent=0
    #allocation6 [shape = 'u8[16384]{0}', space=vmem, size = 0x4000, scoped, tag = 'input window, operand 0']
    #allocation7 [shape = 's32[2]{0}', space=sflag, size = 0x8, scoped, tag = 'scoped memory for tpu_custom_call.1']
    #allocation8 [shape = 's32[2]{0}', space=sflag, size = 0x8, scoped, tag = 'scoped memory for tpu_custom_call.1']
    #allocation9 [shape = 'u8[16384]{0}', space=vmem, size = 0x4000, scoped, tag = 'input window, operand 1']
    #allocation10 [shape = 's32[2]{0}', space=sflag, size = 0x8, scoped, tag = 'scoped memory for tpu_custom_call.1']
    #allocation11 [shape = 'u8[16384]{0}', space=vmem, size = 0x4000, scoped, tag = 'input window, operand 2']
    #allocation12 [shape = 'u8[512]{0}', space=vmem, size = 0x400, scoped, tag = 'input window, operand 3, single buffered']
    #allocation13 [shape = 's32[1]{0}', space=sflag, size = 0x4, scoped, tag = 'scoped memory for tpu_custom_call.1']
    #allocation14 [shape = 'u8[16384]{0}', space=vmem, size = 0x4000, scoped, tag = 'input window, operand 4, single buffered']
    #allocation15 [shape = 'u8[512]{0}', space=vmem, size = 0x400, scoped, tag = 'input window, operand 5, single buffered']
    #allocation16 [shape = 's32[1]{0}', space=sflag, size = 0x4, scoped, tag = 'scoped memory for tpu_custom_call.1']
    #allocation17 [shape = 'u8[16384]{0}', space=vmem, size = 0x4000, scoped, tag = 'input window, operand 6, single buffered']
    #allocation18 [shape = 'u8[512]{0}', space=vmem, size = 0x400, scoped, tag = 'input window, operand 7, single buffered']
    #allocation19 [shape = 's32[1]{0}', space=sflag, size = 0x4, scoped, tag = 'scoped memory for tpu_custom_call.1']
    #allocation20 [shape = 'u8[16384]{0}', space=vmem, size = 0x4000, scoped, tag = 'input window, operand 8, single buffered']
    #allocation21 [shape = 'u8[512]{0}', space=vmem, size = 0x400, scoped, tag = 'input window, operand 9, single buffered']
    #allocation22 [shape = 's32[1]{0}', space=sflag, size = 0x4, scoped, tag = 'scoped memory for tpu_custom_call.1']
    #allocation23 [shape = 'u8[16384]{0}', space=vmem, size = 0x4000, scoped, tag = 'input window, operand 10, single buffered']
    #allocation24 [shape = 'u8[512]{0}', space=vmem, size = 0x400, scoped, tag = 'input window, operand 11, single buffered']
    #allocation25 [shape = 's32[1]{0}', space=sflag, size = 0x4, scoped, tag = 'scoped memory for tpu_custom_call.1']
    #allocation26 [shape = 'u8[16384]{0}', space=vmem, size = 0x4000, scoped, tag = 'output window, operand 0']
    %17 = vsyncpa [#allocation7], 0
    %s18 = scalar_lea.sflag [#allocation7], 1
    %19 = vsyncpa %s18, 0
    %20 = vsyncpa [#allocation10], 0
    %s21 = scalar_lea.sflag [#allocation10], 1
    %22 = vsyncpa %s21, 0
    %23 = vsyncpa [#allocation13], 0
    %24 = vsyncpa [#allocation16], 0
    %25 = vsyncpa [#allocation19], 0
    %26 = vsyncpa [#allocation22], 0
    %27 = vsyncpa [#allocation25], 0
    %28 = vsyncpa [#allocation8], 0
    %s29 = scalar_lea.sflag [#allocation8], 1
    %30 = vsyncpa %s29, 0
    loop: start=0, step=1, limit=4
    $region2: #{tpu_custom_call.1} parent=1 // loop_pre_header
      _
    $region3: #{tpu_custom_call.1} parent=1 // loop_header
      %s32 = sphi 0, %s36
      %p33 = scmp.ge.s32.totalorder %s32, 4
      %s39 = sphi 0, %s51
      %s40 = sphi 0, %s47
      %s41 = sphi 0, %s39
      %s42 = sphi 0, %s40
      %s43 = sphi 0, %s41
      %s44 = sphi 0, %s42
      %s56 = sphi 0, %s58
      %s59 = sphi 0, %s56
      %s60 = sphi 0, %s59
      %s76 = sphi 0, %s60
      %s82 = sphi 0, %s84
      %s85 = sphi 0, %s82
      %s86 = sphi 0, %s85
      %s102 = sphi 0, %s86
      %s110 = sphi 0, %s112
      %s113 = sphi 0, %s110
      %s114 = sphi 0, %s113
      %s130 = sphi 0, %s114
      %s134 = sphi 0, %s134
      %s136 = sphi 0, %s134
      %s137 = sphi 0, %s136
      %s151 = sphi 0, %s137
      %s155 = sphi 0, %s155
      %s157 = sphi 0, %s155
      %s158 = sphi 0, %s157
      %s172 = sphi 0, %s158
      %s176 = sphi 0, %s176
      %s178 = sphi 0, %s176
      %s179 = sphi 0, %s178
      %s193 = sphi 0, %s179
      %s197 = sphi 0, %s197
      %s199 = sphi 0, %s197
      %s200 = sphi 0, %s199
      %s214 = sphi 0, %s200
      %s218 = sphi 0, %s218
      %s220 = sphi 0, %s218
      %s221 = sphi 0, %s220
      %s235 = sphi 0, %s221
      %s239 = sphi 0, %s239
      %s241 = sphi 0, %s239
      %s242 = sphi 0, %s241
      %s256 = sphi 0, %s242
      %s260 = sphi 0, %s260
      %s262 = sphi 0, %s260
      %s263 = sphi 0, %s262
      %s277 = sphi 0, %s263
      %s281 = sphi 0, %s281
      %s283 = sphi 0, %s281
      %s284 = sphi 0, %s283
      %s298 = sphi 0, %s284
      %s302 = sphi 0, %s302
      %s304 = sphi 0, %s302
      %s305 = sphi 0, %s304
      %s319 = sphi 0, %s305
      %s327 = sphi 0, %s329
      %s330 = sphi 0, %s327
      %s331 = sphi 0, %s330
      %s347 = sphi 0, %s331
    $region4: #{tpu_custom_call.1} parent=1 // loop_header_branch
      %35 = sbr.rel (%p33) target = $region8
    $region5: #{tpu_custom_call.1} parent=1 // loop_body
      %s37 = ssub.s32 %s32, 1
      %s38 = ssub.s32 %s32, 2
      %s45 = sadd.s32 1, %s40
      %p46 = scmp.ge.s32.totalorder %s45, 1
      %s47 = scalar_select %p46, 0, %s45
      %s48 = sadd.s32 1, %s39
      %s49 = scalar_select %p46, %s48, %s39
      %p50 = scmp.ge.s32.totalorder %s49, 2
      %s51 = scalar_select %p50, 0, %s49
      %s52 = ssub.s32 %s39, %s51
      %s53 = ssub.s32 %s40, %s47
      %s54 = sor.u32 %s52, %s53
      %p55 = scmp.eq.s32.totalorder %s54, 0
      %s57 = sadd.s32 %s56, 1
      %s58 = scalar_select %p55, %s56, %s57
      %p61 = pneg %p55
      %p62 = scmp.eq.s32.totalorder %s32, 1
      %p63 = por %p61, %p62
      %p64 = scmp.ne.s32.totalorder %s56, %s59
      %p65 = scmp.eq.s32.totalorder %s32, 0
      %p66 = por %p64, %p65
      %p67 = scmp.ne.s32.totalorder %s56, %s59
      %p68 = scmp.eq.s32.totalorder %s37, 1
      %p69 = por %p67, %p68
      %p70 = scmp.ne.s32.totalorder %s59, %s60
      %p71 = scmp.eq.s32.totalorder %s37, 0
      %p72 = por %p70, %p71
      %p73 = scmp.ne.s32.totalorder %s59, %s60
      %p74 = scmp.eq.s32.totalorder %s38, 1
      %p75 = por %p73, %p74
      %p77 = scmp.ne.s32.totalorder %s60, %s76
      %p78 = scmp.eq.s32.totalorder %s38, 0
      %p79 = por %p77, %p78
      %s80 = ssub.s32 %s39, %s51
      %p81 = scmp.eq.s32.totalorder %s80, 0
      %s83 = sadd.s32 %s82, 1
      %s84 = scalar_select %p81, %s82, %s83
      %p87 = pneg %p81
      %p88 = scmp.eq.s32.totalorder %s32, 1
      %p89 = por %p87, %p88
      %p90 = scmp.ne.s32.totalorder %s82, %s85
      %p91 = scmp.eq.s32.totalorder %s32, 0
      %p92 = por %p90, %p91
      %p93 = scmp.ne.s32.totalorder %s82, %s85
      %p94 = scmp.eq.s32.totalorder %s37, 1
      %p95 = por %p93, %p94
      %p96 = scmp.ne.s32.totalorder %s85, %s86
      %p97 = scmp.eq.s32.totalorder %s37, 0
      %p98 = por %p96, %p97
      %p99 = scmp.ne.s32.totalorder %s85, %s86
      %p100 = scmp.eq.s32.totalorder %s38, 1
      %p101 = por %p99, %p100
      %p103 = scmp.ne.s32.totalorder %s86, %s102
      %p104 = scmp.eq.s32.totalorder %s38, 0
      %p105 = por %p103, %p104
      %s106 = ssub.s32 %s39, %s51
      %s107 = ssub.s32 %s40, %s47
      %s108 = sor.u32 %s106, %s107
      %p109 = scmp.eq.s32.totalorder %s108, 0
      %s111 = sadd.s32 %s110, 1
      %s112 = scalar_select %p109, %s110, %s111
      %p115 = pneg %p109
      %p116 = scmp.eq.s32.totalorder %s32, 1
      %p117 = por %p115, %p116
      %p118 = scmp.ne.s32.totalorder %s110, %s113
      %p119 = scmp.eq.s32.totalorder %s32, 0
      %p120 = por %p118, %p119
      %p121 = scmp.ne.s32.totalorder %s110, %s113
      %p122 = scmp.eq.s32.totalorder %s37, 1
      %p123 = por %p121, %p122
      %p124 = scmp.ne.s32.totalorder %s113, %s114
      %p125 = scmp.eq.s32.totalorder %s37, 0
      %p126 = por %p124, %p125
      %p127 = scmp.ne.s32.totalorder %s113, %s114
      %p128 = scmp.eq.s32.totalorder %s38, 1
      %p129 = por %p127, %p128
      %p131 = scmp.ne.s32.totalorder %s114, %s130
      %p132 = scmp.eq.s32.totalorder %s38, 0
      %p133 = por %p131, %p132
      %s135 = sadd.s32 %s134, 1
      %p138 = scmp.eq.s32.totalorder %s32, 1
      %p139 = scmp.ne.s32.totalorder %s134, %s136
      %p140 = scmp.eq.s32.totalorder %s32, 0
      %p141 = por %p139, %p140
      %p142 = scmp.ne.s32.totalorder %s134, %s136
      %p143 = scmp.eq.s32.totalorder %s37, 1
      %p144 = por %p142, %p143
      %p145 = scmp.ne.s32.totalorder %s136, %s137
      %p146 = scmp.eq.s32.totalorder %s37, 0
      %p147 = por %p145, %p146
      %p148 = scmp.ne.s32.totalorder %s136, %s137
      %p149 = scmp.eq.s32.totalorder %s38, 1
      %p150 = por %p148, %p149
      %p152 = scmp.ne.s32.totalorder %s137, %s151
      %p153 = scmp.eq.s32.totalorder %s38, 0
      %p154 = por %p152, %p153
      %s156 = sadd.s32 %s155, 1
      %p159 = scmp.eq.s32.totalorder %s32, 1
      %p160 = scmp.ne.s32.totalorder %s155, %s157
      %p161 = scmp.eq.s32.totalorder %s32, 0
      %p162 = por %p160, %p161
      %p163 = scmp.ne.s32.totalorder %s155, %s157
      %p164 = scmp.eq.s32.totalorder %s37, 1
      %p165 = por %p163, %p164
      %p166 = scmp.ne.s32.totalorder %s157, %s158
      %p167 = scmp.eq.s32.totalorder %s37, 0
      %p168 = por %p166, %p167
      %p169 = scmp.ne.s32.totalorder %s157, %s158
      %p170 = scmp.eq.s32.totalorder %s38, 1
      %p171 = por %p169, %p170
      %p173 = scmp.ne.s32.totalorder %s158, %s172
      %p174 = scmp.eq.s32.totalorder %s38, 0
      %p175 = por %p173, %p174
      %s177 = sadd.s32 %s176, 1
      %p180 = scmp.eq.s32.totalorder %s32, 1
      %p181 = scmp.ne.s32.totalorder %s176, %s178
      %p182 = scmp.eq.s32.totalorder %s32, 0
      %p183 = por %p181, %p182
      %p184 = scmp.ne.s32.totalorder %s176, %s178
      %p185 = scmp.eq.s32.totalorder %s37, 1
      %p186 = por %p184, %p185
      %p187 = scmp.ne.s32.totalorder %s178, %s179
      %p188 = scmp.eq.s32.totalorder %s37, 0
      %p189 = por %p187, %p188
      %p190 = scmp.ne.s32.totalorder %s178, %s179
      %p191 = scmp.eq.s32.totalorder %s38, 1
      %p192 = por %p190, %p191
      %p194 = scmp.ne.s32.totalorder %s179, %s193
      %p195 = scmp.eq.s32.totalorder %s38, 0
      %p196 = por %p194, %p195
      %s198 = sadd.s32 %s197, 1
      %p201 = scmp.eq.s32.totalorder %s32, 1
      %p202 = scmp.ne.s32.totalorder %s197, %s199
      %p203 = scmp.eq.s32.totalorder %s32, 0
      %p204 = por %p202, %p203
      %p205 = scmp.ne.s32.totalorder %s197, %s199
      %p206 = scmp.eq.s32.totalorder %s37, 1
      %p207 = por %p205, %p206
      %p208 = scmp.ne.s32.totalorder %s199, %s200
      %p209 = scmp.eq.s32.totalorder %s37, 0
      %p210 = por %p208, %p209
      %p211 = scmp.ne.s32.totalorder %s199, %s200
      %p212 = scmp.eq.s32.totalorder %s38, 1
      %p213 = por %p211, %p212
      %p215 = scmp.ne.s32.totalorder %s200, %s214
      %p216 = scmp.eq.s32.totalorder %s38, 0
      %p217 = por %p215, %p216
      %s219 = sadd.s32 %s218, 1
      %p222 = scmp.eq.s32.totalorder %s32, 1
      %p223 = scmp.ne.s32.totalorder %s218, %s220
      %p224 = scmp.eq.s32.totalorder %s32, 0
      %p225 = por %p223, %p224
      %p226 = scmp.ne.s32.totalorder %s218, %s220
      %p227 = scmp.eq.s32.totalorder %s37, 1
      %p228 = por %p226, %p227
      %p229 = scmp.ne.s32.totalorder %s220, %s221
      %p230 = scmp.eq.s32.totalorder %s37, 0
      %p231 = por %p229, %p230
      %p232 = scmp.ne.s32.totalorder %s220, %s221
      %p233 = scmp.eq.s32.totalorder %s38, 1
      %p234 = por %p232, %p233
      %p236 = scmp.ne.s32.totalorder %s221, %s235
      %p237 = scmp.eq.s32.totalorder %s38, 0
      %p238 = por %p236, %p237
      %s240 = sadd.s32 %s239, 1
      %p243 = scmp.eq.s32.totalorder %s32, 1
      %p244 = scmp.ne.s32.totalorder %s239, %s241
      %p245 = scmp.eq.s32.totalorder %s32, 0
      %p246 = por %p244, %p245
      %p247 = scmp.ne.s32.totalorder %s239, %s241
      %p248 = scmp.eq.s32.totalorder %s37, 1
      %p249 = por %p247, %p248
      %p250 = scmp.ne.s32.totalorder %s241, %s242
      %p251 = scmp.eq.s32.totalorder %s37, 0
      %p252 = por %p250, %p251
      %p253 = scmp.ne.s32.totalorder %s241, %s242
      %p254 = scmp.eq.s32.totalorder %s38, 1
      %p255 = por %p253, %p254
      %p257 = scmp.ne.s32.totalorder %s242, %s256
      %p258 = scmp.eq.s32.totalorder %s38, 0
      %p259 = por %p257, %p258
      %s261 = sadd.s32 %s260, 1
      %p264 = scmp.eq.s32.totalorder %s32, 1
      %p265 = scmp.ne.s32.totalorder %s260, %s262
      %p266 = scmp.eq.s32.totalorder %s32, 0
      %p267 = por %p265, %p266
      %p268 = scmp.ne.s32.totalorder %s260, %s262
      %p269 = scmp.eq.s32.totalorder %s37, 1
      %p270 = por %p268, %p269
      %p271 = scmp.ne.s32.totalorder %s262, %s263
      %p272 = scmp.eq.s32.totalorder %s37, 0
      %p273 = por %p271, %p272
      %p274 = scmp.ne.s32.totalorder %s262, %s263
      %p275 = scmp.eq.s32.totalorder %s38, 1
      %p276 = por %p274, %p275
      %p278 = scmp.ne.s32.totalorder %s263, %s277
      %p279 = scmp.eq.s32.totalorder %s38, 0
      %p280 = por %p278, %p279
      %s282 = sadd.s32 %s281, 1
      %p285 = scmp.eq.s32.totalorder %s32, 1
      %p286 = scmp.ne.s32.totalorder %s281, %s283
      %p287 = scmp.eq.s32.totalorder %s32, 0
      %p288 = por %p286, %p287
      %p289 = scmp.ne.s32.totalorder %s281, %s283
      %p290 = scmp.eq.s32.totalorder %s37, 1
      %p291 = por %p289, %p290
      %p292 = scmp.ne.s32.totalorder %s283, %s284
      %p293 = scmp.eq.s32.totalorder %s37, 0
      %p294 = por %p292, %p293
      %p295 = scmp.ne.s32.totalorder %s283, %s284
      %p296 = scmp.eq.s32.totalorder %s38, 1
      %p297 = por %p295, %p296
      %p299 = scmp.ne.s32.totalorder %s284, %s298
      %p300 = scmp.eq.s32.totalorder %s38, 0
      %p301 = por %p299, %p300
      %s303 = sadd.s32 %s302, 1
      %p306 = scmp.eq.s32.totalorder %s32, 1
      %p307 = scmp.ne.s32.totalorder %s302, %s304
      %p308 = scmp.eq.s32.totalorder %s32, 0
      %p309 = por %p307, %p308
      %p310 = scmp.ne.s32.totalorder %s302, %s304
      %p311 = scmp.eq.s32.totalorder %s37, 1
      %p312 = por %p310, %p311
      %p313 = scmp.ne.s32.totalorder %s304, %s305
      %p314 = scmp.eq.s32.totalorder %s37, 0
      %p315 = por %p313, %p314
      %p316 = scmp.ne.s32.totalorder %s304, %s305
      %p317 = scmp.eq.s32.totalorder %s38, 1
      %p318 = por %p316, %p317
      %p320 = scmp.ne.s32.totalorder %s305, %s319
      %p321 = scmp.eq.s32.totalorder %s38, 0
      %p322 = por %p320, %p321
      %s323 = ssub.s32 %s39, %s51
      %s324 = ssub.s32 %s40, %s47
      %s325 = sor.u32 %s323, %s324
      %p326 = scmp.eq.s32.totalorder %s325, 0
      %s328 = sadd.s32 %s327, 1
      %s329 = scalar_select %p326, %s327, %s328
      %p332 = pneg %p326
      %p333 = scmp.eq.s32.totalorder %s32, 1
      %p334 = por %p332, %p333
      %p335 = scmp.ne.s32.totalorder %s327, %s330
      %p336 = scmp.eq.s32.totalorder %s32, 0
      %p337 = por %p335, %p336
      %p338 = scmp.ne.s32.totalorder %s327, %s330
      %p339 = scmp.eq.s32.totalorder %s37, 1
      %p340 = por %p338, %p339
      %p341 = scmp.ne.s32.totalorder %s330, %s331
      %p342 = scmp.eq.s32.totalorder %s37, 0
      %p343 = por %p341, %p342
      %p344 = scmp.ne.s32.totalorder %s330, %s331
      %p345 = scmp.eq.s32.totalorder %s38, 1
      %p346 = por %p344, %p345
      %p348 = scmp.ne.s32.totalorder %s331, %s347
      %p349 = scmp.eq.s32.totalorder %s38, 0
      %p350 = por %p348, %p349
      %p351 = scmp.le.s32.totalorder 1, %s32
      %p352 = scmp.lt.s32.totalorder %s32, 3
      %p353 = pnand %p351, %p352
      %p354 = pneg %p353
      // Predicated region
      $region9: #{tpu_custom_call.1} parent=5 // pred_check
        _
      $region10: #{tpu_custom_call.1} parent=5 // pred_check_branch
        %356 = sbr.rel (%p353) target = $region12
      $region11: #{tpu_custom_call.1} parent=5 // pred_region
        %s357 = ssub.s32 %s32, 1
        // Predicated region
        $region13: #{tpu_custom_call.1} parent=11 // pred_check
          %p358 = pneg %p147
        $region14: #{tpu_custom_call.1} parent=11 // pred_check_branch
          %360 = sbr.rel (%p358) target = $region16
        $region15: #{tpu_custom_call.1} parent=11 // pred_region
          %s362 = ssub.s32 16, 16
          %363 = vsyncadd [#allocation13], %s362
          %s365 = sshll.u32 [#allocation12], 4
          %s366 = int_to_ptr.vmem [resolvable:$true] %s365
          %368 = dma.hbm_to_vmem [thread:$0]  %s3, 16, %s366, [#allocation13]
        $region16: #{tpu_custom_call.1} parent=11 // pred_fallthru
          _
        // Predicated region
        $region17: #{tpu_custom_call.1} parent=11 // pred_check
          %p369 = pneg %p168
        $region18: #{tpu_custom_call.1} parent=11 // pred_check_branch
          %371 = sbr.rel (%p369) target = $region20
        $region19: #{tpu_custom_call.1} parent=11 // pred_region
          %s373 = ssub.s32 512, 512
          %374 = vsyncadd [#allocation13], %s373
          %s375 = sshll.u32 [#allocation14], 4
          %s376 = int_to_ptr.vmem [resolvable:$true] %s375
          %381 = dma.hbm_to_vmem [thread:$0]  %s4, 512, %s376, [#allocation13], 128, 128, 8
        $region20: #{tpu_custom_call.1} parent=11 // pred_fallthru
          _
        // Predicated region
        $region21: #{tpu_custom_call.1} parent=11 // pred_check
          %p382 = pneg %p189
        $region22: #{tpu_custom_call.1} parent=11 // pred_check_branch
          %384 = sbr.rel (%p382) target = $region24
        $region23: #{tpu_custom_call.1} parent=11 // pred_region
          %s386 = ssub.s32 16, 16
          %387 = vsyncadd [#allocation16], %s386
          %s389 = sshll.u32 [#allocation15], 4
          %s390 = int_to_ptr.vmem [resolvable:$true] %s389
          %392 = dma.hbm_to_vmem [thread:$0]  %s5, 16, %s390, [#allocation16]
        $region24: #{tpu_custom_call.1} parent=11 // pred_fallthru
          _
        // Predicated region
        $region25: #{tpu_custom_call.1} parent=11 // pred_check
          %p393 = pneg %p210
        $region26: #{tpu_custom_call.1} parent=11 // pred_check_branch
          %395 = sbr.rel (%p393) target = $region28
        $region27: #{tpu_custom_call.1} parent=11 // pred_region
          %s397 = ssub.s32 512, 512
          %398 = vsyncadd [#allocation16], %s397
          %s399 = sshll.u32 [#allocation17], 4
          %s400 = int_to_ptr.vmem [resolvable:$true] %s399
          %405 = dma.hbm_to_vmem [thread:$0]  %s6, 512, %s400, [#allocation16], 128, 128, 8
        $region28: #{tpu_custom_call.1} parent=11 // pred_fallthru
          _
        // Predicated region
        $region29: #{tpu_custom_call.1} parent=11 // pred_check
          %p406 = pneg %p231
        $region30: #{tpu_custom_call.1} parent=11 // pred_check_branch
          %408 = sbr.rel (%p406) target = $region32
        $region31: #{tpu_custom_call.1} parent=11 // pred_region
          %s410 = ssub.s32 16, 16
          %411 = vsyncadd [#allocation19], %s410
          %s413 = sshll.u32 [#allocation18], 4
          %s414 = int_to_ptr.vmem [resolvable:$true] %s413
          %416 = dma.hbm_to_vmem [thread:$0]  %s7, 16, %s414, [#allocation19]
        $region32: #{tpu_custom_call.1} parent=11 // pred_fallthru
          _
        // Predicated region
        $region33: #{tpu_custom_call.1} parent=11 // pred_check
          %p417 = pneg %p252
        $region34: #{tpu_custom_call.1} parent=11 // pred_check_branch
          %419 = sbr.rel (%p417) target = $region36
        $region35: #{tpu_custom_call.1} parent=11 // pred_region
          %s421 = ssub.s32 512, 512
          %422 = vsyncadd [#allocation19], %s421
          %s423 = sshll.u32 [#allocation20], 4
          %s424 = int_to_ptr.vmem [resolvable:$true] %s423
          %429 = dma.hbm_to_vmem [thread:$0]  %s8, 512, %s424, [#allocation19], 128, 128, 8
        $region36: #{tpu_custom_call.1} parent=11 // pred_fallthru
          _
        // Predicated region
        $region37: #{tpu_custom_call.1} parent=11 // pred_check
          %p430 = pneg %p273
        $region38: #{tpu_custom_call.1} parent=11 // pred_check_branch
          %432 = sbr.rel (%p430) target = $region40
        $region39: #{tpu_custom_call.1} parent=11 // pred_region
          %s434 = ssub.s32 16, 16
          %435 = vsyncadd [#allocation22], %s434
          %s437 = sshll.u32 [#allocation21], 4
          %s438 = int_to_ptr.vmem [resolvable:$true] %s437
          %440 = dma.hbm_to_vmem [thread:$0]  %s9, 16, %s438, [#allocation22]
        $region40: #{tpu_custom_call.1} parent=11 // pred_fallthru
          _
        // Predicated region
        $region41: #{tpu_custom_call.1} parent=11 // pred_check
          %p441 = pneg %p294
        $region42: #{tpu_custom_call.1} parent=11 // pred_check_branch
          %443 = sbr.rel (%p441) target = $region44
        $region43: #{tpu_custom_call.1} parent=11 // pred_region
          %s445 = ssub.s32 512, 512
          %446 = vsyncadd [#allocation22], %s445
          %s447 = sshll.u32 [#allocation23], 4
          %s448 = int_to_ptr.vmem [resolvable:$true] %s447
          %453 = dma.hbm_to_vmem [thread:$0]  %s10, 512, %s448, [#allocation22], 128, 128, 8
        $region44: #{tpu_custom_call.1} parent=11 // pred_fallthru
          _
        // Predicated region
        $region45: #{tpu_custom_call.1} parent=11 // pred_check
          %p454 = pneg %p315
        $region46: #{tpu_custom_call.1} parent=11 // pred_check_branch
          %456 = sbr.rel (%p454) target = $region48
        $region47: #{tpu_custom_call.1} parent=11 // pred_region
          %s458 = ssub.s32 16, 16
          %459 = vsyncadd [#allocation25], %s458
          %s461 = sshll.u32 [#allocation24], 4
          %s462 = int_to_ptr.vmem [resolvable:$true] %s461
          %464 = dma.hbm_to_vmem [thread:$0]  %s11, 16, %s462, [#allocation25]
        $region48: #{tpu_custom_call.1} parent=11 // pred_fallthru
          _
      $region12: #{tpu_custom_call.1} parent=5 // pred_fallthru
        _
      %p465 = scmp.lt.s32.totalorder %s32, 2
      // Predicated region
      $region49: #{tpu_custom_call.1} parent=5 // pred_check
        %p466 = pneg %p465
      $region50: #{tpu_custom_call.1} parent=5 // pred_check_branch
        %468 = sbr.rel (%p466) target = $region52
      $region51: #{tpu_custom_call.1} parent=5 // pred_region
        // Predicated region
        $region53: #{tpu_custom_call.1} parent=51 // pred_check
          %p469 = pneg %p66
        $region54: #{tpu_custom_call.1} parent=51 // pred_check_branch
          %471 = sbr.rel (%p469) target = $region56
        $region55: #{tpu_custom_call.1} parent=51 // pred_region
          %s472 = sand.u32 %s56, 1
          %s473 = scalar_lea.sflag [#allocation7], %s472
          %s474 = sand.u32 %s56, 1
          %s475 = smul.addr %s474, 16
          %s476 = scalar_lea.vmem [#allocation6], %s475
          %s477 = smul.u32 2, %s40
          %s479 = ssub.s32 256, 256
          %480 = vsyncadd %s473, %s479
          %s481 = smul.addr %s39, 2
          %s482 = sadd.s32 %s477, %s481
          %s483 = smul.addr %s482, 128
          %s484 = scalar_lea.hbm %s0, %s483
          %s485 = sshll.u32 %s476, 4
          %s486 = int_to_ptr.vmem [resolvable:$true] %s485
          %491 = dma.hbm_to_vmem [thread:$0]  %s484, 256, %s486, %s473, 128, 128, 8
        $region56: #{tpu_custom_call.1} parent=51 // pred_fallthru
          _
        // Predicated region
        $region57: #{tpu_custom_call.1} parent=51 // pred_check
          %p492 = pneg %p92
        $region58: #{tpu_custom_call.1} parent=51 // pred_check_branch
          %494 = sbr.rel (%p492) target = $region60
        $region59: #{tpu_custom_call.1} parent=51 // pred_region
          %s495 = sand.u32 %s32, 1
          %s496 = scalar_lea.sflag [#allocation10], %s495
          %s497 = sand.u32 %s82, 1
          %s498 = smul.addr %s497, 16
          %s499 = scalar_lea.vmem [#allocation9], %s498
          %s501 = ssub.s32 256, 256
          %502 = vsyncadd %s496, %s501
          %s503 = smul.addr %s39, 2
          %s504 = smul.addr %s503, 128
          %s505 = scalar_lea.hbm %s1, %s504
          %s506 = sshll.u32 %s499, 4
          %s507 = int_to_ptr.vmem [resolvable:$true] %s506
          %512 = dma.hbm_to_vmem [thread:$0]  %s505, 256, %s507, %s496, 128, 128, 8
        $region60: #{tpu_custom_call.1} parent=51 // pred_fallthru
          _
        // Predicated region
        $region61: #{tpu_custom_call.1} parent=51 // pred_check
          %p513 = pneg %p120
        $region62: #{tpu_custom_call.1} parent=51 // pred_check_branch
          %515 = sbr.rel (%p513) target = $region64
        $region63: #{tpu_custom_call.1} parent=51 // pred_region
          %s516 = sand.u32 %s32, 1
          %s517 = scalar_lea.sflag [#allocation10], %s516
          %s518 = sand.u32 %s110, 1
          %s519 = smul.addr %s518, 16
          %s520 = scalar_lea.vmem [#allocation11], %s519
          %s521 = smul.u32 2, %s40
          %s523 = ssub.s32 256, 256
          %524 = vsyncadd %s517, %s523
          %s525 = smul.addr %s39, 2
          %s526 = sadd.s32 %s521, %s525
          %s527 = smul.addr %s526, 128
          %s528 = scalar_lea.hbm %s2, %s527
          %s529 = sshll.u32 %s520, 4
          %s530 = int_to_ptr.vmem [resolvable:$true] %s529
          %535 = dma.hbm_to_vmem [thread:$0]  %s528, 256, %s530, %s517, 128, 128, 8
        $region64: #{tpu_custom_call.1} parent=51 // pred_fallthru
          _
      $region52: #{tpu_custom_call.1} parent=5 // pred_fallthru
        _
      %p536 = scmp.le.s32.totalorder 1, %s32
      %p537 = scmp.lt.s32.totalorder %s32, 3
      %p538 = pnand %p536, %p537
      %p539 = pneg %p538
      // Predicated region
      $region65: #{tpu_custom_call.1} parent=5 // pred_check
        _
      $region66: #{tpu_custom_call.1} parent=5 // pred_check_branch
        %541 = sbr.rel (%p538) target = $region68
      $region67: #{tpu_custom_call.1} parent=5 // pred_region
        %s542 = ssub.s32 %s32, 1
        %s543 = sand.u32 %s59, 1
        %s544 = scalar_lea.sflag [#allocation7], %s543
        %s545 = sand.u32 %s59, 1
        %s546 = smul.addr %s545, 16
        %s547 = scalar_lea.vmem [#allocation6], %s546
        // Predicated region
        $region69: #{tpu_custom_call.1} parent=67 // pred_check
          %p548 = pneg %p72
        $region70: #{tpu_custom_call.1} parent=67 // pred_check_branch
          %550 = sbr.rel (%p548) target = $region72
        $region71: #{tpu_custom_call.1} parent=67 // pred_region
          %551 = dma.done %s544, 256
        $region72: #{tpu_custom_call.1} parent=67 // pred_fallthru
          _
        %s552 = sand.u32 %s37, 1
        %s553 = scalar_lea.sflag [#allocation10], %s552
        %s554 = sand.u32 %s85, 1
        %s555 = smul.addr %s554, 16
        %s556 = scalar_lea.vmem [#allocation9], %s555
        // Predicated region
        $region73: #{tpu_custom_call.1} parent=67 // pred_check
          %p557 = pneg %p98
        $region74: #{tpu_custom_call.1} parent=67 // pred_check_branch
          %559 = sbr.rel (%p557) target = $region76
        $region75: #{tpu_custom_call.1} parent=67 // pred_region
          %560 = dma.done %s553, 256
        $region76: #{tpu_custom_call.1} parent=67 // pred_fallthru
          _
        %s561 = sand.u32 %s37, 1
        %s562 = scalar_lea.sflag [#allocation10], %s561
        %s563 = sand.u32 %s113, 1
        %s564 = smul.addr %s563, 16
        %s565 = scalar_lea.vmem [#allocation11], %s564
        // Predicated region
        $region77: #{tpu_custom_call.1} parent=67 // pred_check
          %p566 = pneg %p126
        $region78: #{tpu_custom_call.1} parent=67 // pred_check_branch
          %568 = sbr.rel (%p566) target = $region80
        $region79: #{tpu_custom_call.1} parent=67 // pred_region
          %569 = dma.done %s562, 256
        $region80: #{tpu_custom_call.1} parent=67 // pred_fallthru
          _
        // Predicated region
        $region81: #{tpu_custom_call.1} parent=67 // pred_check
          %p570 = pneg %p147
        $region82: #{tpu_custom_call.1} parent=67 // pred_check_branch
          %572 = sbr.rel (%p570) target = $region84
        $region83: #{tpu_custom_call.1} parent=67 // pred_region
          %573 = dma.done [#allocation13], 16
        $region84: #{tpu_custom_call.1} parent=67 // pred_fallthru
          _
        // Predicated region
        $region85: #{tpu_custom_call.1} parent=67 // pred_check
          %p574 = pneg %p168
        $region86: #{tpu_custom_call.1} parent=67 // pred_check_branch
          %576 = sbr.rel (%p574) target = $region88
        $region87: #{tpu_custom_call.1} parent=67 // pred_region
          %577 = dma.done [#allocation13], 512
        $region88: #{tpu_custom_call.1} parent=67 // pred_fallthru
          _
        // Predicated region
        $region89: #{tpu_custom_call.1} parent=67 // pred_check
          %p578 = pneg %p189
        $region90: #{tpu_custom_call.1} parent=67 // pred_check_branch
          %580 = sbr.rel (%p578) target = $region92
        $region91: #{tpu_custom_call.1} parent=67 // pred_region
          %581 = dma.done [#allocation16], 16
        $region92: #{tpu_custom_call.1} parent=67 // pred_fallthru
          _
        // Predicated region
        $region93: #{tpu_custom_call.1} parent=67 // pred_check
          %p582 = pneg %p210
        $region94: #{tpu_custom_call.1} parent=67 // pred_check_branch
          %584 = sbr.rel (%p582) target = $region96
        $region95: #{tpu_custom_call.1} parent=67 // pred_region
          %585 = dma.done [#allocation16], 512
        $region96: #{tpu_custom_call.1} parent=67 // pred_fallthru
          _
        // Predicated region
        $region97: #{tpu_custom_call.1} parent=67 // pred_check
          %p586 = pneg %p231
        $region98: #{tpu_custom_call.1} parent=67 // pred_check_branch
          %588 = sbr.rel (%p586) target = $region100
        $region99: #{tpu_custom_call.1} parent=67 // pred_region
          %589 = dma.done [#allocation19], 16
        $region100: #{tpu_custom_call.1} parent=67 // pred_fallthru
          _
        // Predicated region
        $region101: #{tpu_custom_call.1} parent=67 // pred_check
          %p590 = pneg %p252
        $region102: #{tpu_custom_call.1} parent=67 // pred_check_branch
          %592 = sbr.rel (%p590) target = $region104
        $region103: #{tpu_custom_call.1} parent=67 // pred_region
          %593 = dma.done [#allocation19], 512
        $region104: #{tpu_custom_call.1} parent=67 // pred_fallthru
          _
        // Predicated region
        $region105: #{tpu_custom_call.1} parent=67 // pred_check
          %p594 = pneg %p273
        $region106: #{tpu_custom_call.1} parent=67 // pred_check_branch
          %596 = sbr.rel (%p594) target = $region108
        $region107: #{tpu_custom_call.1} parent=67 // pred_region
          %597 = dma.done [#allocation22], 16
        $region108: #{tpu_custom_call.1} parent=67 // pred_fallthru
          _
        // Predicated region
        $region109: #{tpu_custom_call.1} parent=67 // pred_check
          %p598 = pneg %p294
        $region110: #{tpu_custom_call.1} parent=67 // pred_check_branch
          %600 = sbr.rel (%p598) target = $region112
        $region111: #{tpu_custom_call.1} parent=67 // pred_region
          %601 = dma.done [#allocation22], 512
        $region112: #{tpu_custom_call.1} parent=67 // pred_fallthru
          _
        // Predicated region
        $region113: #{tpu_custom_call.1} parent=67 // pred_check
          %p602 = pneg %p315
        $region114: #{tpu_custom_call.1} parent=67 // pred_check_branch
          %604 = sbr.rel (%p602) target = $region116
        $region115: #{tpu_custom_call.1} parent=67 // pred_region
          %605 = dma.done [#allocation25], 16
        $region116: #{tpu_custom_call.1} parent=67 // pred_fallthru
          _
        %s606 = sand.u32 %s59, 1
        %s607 = scalar_lea.sflag [#allocation7], %s606
        %s608 = sand.u32 %s59, 1
        %s609 = smul.addr %s608, 16
        %s610 = scalar_lea.vmem [#allocation6], %s609
        %p611 = pneg %p72
        %p612 = pneg %p69
        %s613 = sand.u32 %s37, 1
        %s614 = scalar_lea.sflag [#allocation10], %s613
        %s615 = sand.u32 %s85, 1
        %s616 = smul.addr %s615, 16
        %s617 = scalar_lea.vmem [#allocation9], %s616
        %p618 = pneg %p98
        %p619 = pneg %p95
        %s620 = sand.u32 %s37, 1
        %s621 = scalar_lea.sflag [#allocation10], %s620
        %s622 = sand.u32 %s113, 1
        %s623 = smul.addr %s622, 16
        %s624 = scalar_lea.vmem [#allocation11], %s623
        %p625 = pneg %p126
        %p626 = pneg %p123
        %p627 = pneg %p147
        %p628 = pneg %p144
        %p629 = pneg %p168
        %p630 = pneg %p165
        %p631 = pneg %p189
        %p632 = pneg %p186
        %p633 = pneg %p210
        %p634 = pneg %p207
        %p635 = pneg %p231
        %p636 = pneg %p228
        %p637 = pneg %p252
        %p638 = pneg %p249
        %p639 = pneg %p273
        %p640 = pneg %p270
        %p641 = pneg %p294
        %p642 = pneg %p291
        %p643 = pneg %p315
        %p644 = pneg %p312
        %p645 = pneg %p343
        %p646 = pneg %p340
        %s647 = sand.u32 %s330, 1
        %s648 = scalar_lea.sflag [#allocation8], %s647
        %s649 = sand.u32 %s330, 1
        %s650 = smul.addr %s649, 16
        %s651 = scalar_lea.vmem [#allocation26], %s650
        %s652 = smul.u32 2, %s42
        %s653 = smul.u32 2, %s42
        %s654 = smul.u32 2, %s42
        %p655 = scmp.eq.s32.totalorder %s42, 0
        // Predicated region
        $region117: #{tpu_custom_call.1} parent=67 // pred_check
          %p656 = pneg %p655
        $region118: #{tpu_custom_call.1} parent=67 // pred_check_branch
          %658 = sbr.rel (%p656) target = $region120
        $region119: #{tpu_custom_call.1} parent=67 // pred_region
          %v659 = vld [vmem:[%s556] sm:$0xff]
          %v660 = vld [vmem:[%s556 + $0x8] sm:$0xff]
          %v661 = vld [vmem:[#allocation17] sm:$0xff]
          %v662 = vld [vmem:[#allocation17 + $0x8] sm:$0xff]
          %v663 = vld [vmem:[#allocation17 + $0x10] sm:$0xff]
          %v664 = vld [vmem:[#allocation17 + $0x18] sm:$0xff]
          %v665 = vld [vmem:[#allocation18] sm:$0x1]
          %v667 = vlaneseq
          %v668 = vshrl.u32 %v667, 7
          %v669 = vsub.s32 0, %v668
          %v670 = vrot.slane %v665, %v669
          %vm672 = vcmask 261120
          %v674 = vsel %vm672, %v659, 0
          %v677 = vsel %vm672, %v660, 0
          %679 = vmatprep.subr.mxu0 0.0
          %680 = vmatpush1.msra.mxu0 %v661
          %681 = vmatprep.subr.mxu0 0.0
          %682 = vmatpush1.msra.mxu0 %v662
          %683 = vmatprep.subr.mxu0 0.0
          %684 = vmatpush1.msra.mxu0 %v663
          %685 = vmatprep.subr.mxu0 0.0
          %686 = vmatpush1.msra.mxu0 %v664
          %687 = vmatprep.subr.mxu0 0.0
          %688 = vmatpush1.msra.mxu0 0.0
          %689 = vmatprep.subr.mxu0 0.0
          %690 = vmatpush1.msra.mxu0 0.0
          %691 = vmatprep.subr.mxu0 0.0
          %692 = vmatpush1.msra.mxu0 0.0
          %693 = vmatprep.subr.mxu0 0.0
          %694 = vmatpush1.msra.mxu0 0.0
          %695 = vmatprep.subr.mxu0 0.0
          %696 = vmatpush1.msra.mxu0 0.0
          %697 = vmatprep.subr.mxu0 0.0
          %698 = vmatpush1.msra.mxu0 0.0
          %699 = vmatprep.subr.mxu0 0.0
          %700 = vmatpush1.msra.mxu0 0.0
          %701 = vmatprep.subr.mxu0 0.0
          %702 = vmatpush1.msra.mxu0 0.0
          %703 = vmatprep.subr.mxu0 0.0
          %704 = vmatpush1.msra.mxu0 0.0
          %705 = vmatprep.subr.mxu0 0.0
          %706 = vmatpush1.msra.mxu0 0.0
          %707 = vmatprep.subr.mxu0 0.0
          %708 = vmatpush1.msra.mxu0 0.0
          %709 = vmatprep.subr.mxu0 0.0
          %710 = vmatpush1.msra.mxu0 0.0
          %711 = vmatprep.subr.mxu0 0.0
          %712 = vmatpush1.msra.mxu0 0.0
          %713 = vmatprep.subr.mxu0 0.0
          %714 = vmatpush1.msra.mxu0 0.0
          %715 = vmatprep.subr.mxu0 0.0
          %716 = vmatpush1.msra.mxu0 0.0
          %717 = vmatprep.subr.mxu0 0.0
          %718 = vmatpush1.msra.mxu0 0.0
          %719 = vmatprep.subr.mxu0 0.0
          %720 = vmatpush1.msra.mxu0 0.0
          %721 = vmatprep.subr.mxu0 0.0
          %722 = vmatpush1.msra.mxu0 0.0
          %723 = vmatprep.subr.mxu0 0.0
          %724 = vmatpush1.msra.mxu0 0.0
          %725 = vmatprep.subr.mxu0 0.0
          %726 = vmatpush1.msra.mxu0 0.0
          %727 = vmatprep.subr.mxu0 0.0
          %728 = vmatpush1.msra.mxu0 0.0
          %729 = vmatprep.subr.mxu0 0.0
          %730 = vmatpush1.msra.mxu0 0.0
          %731 = vmatprep.subr.mxu0 0.0
          %732 = vmatpush1.msra.mxu0 0.0
          %733 = vmatprep.subr.mxu0 0.0
          %734 = vmatpush1.msra.mxu0 0.0
          %735 = vmatprep.subr.mxu0 0.0
          %736 = vmatpush1.msra.mxu0 0.0
          %737 = vmatprep.subr.mxu0 0.0
          %738 = vmatpush1.msra.mxu0 0.0
          %739 = vmatprep.subr.mxu0 0.0
          %740 = vmatpush1.msra.mxu0 0.0
          %741 = vmatprep.subr.mxu0 0.0
          %742 = vmatpush1.msra.mxu0 0.0
          %743 = vmatprep.mubr.f32.mxu0 0.0
          %744 = vmatmul.mubr.f32.gmra.mrb[0].mxu0 %v674
          %v745 = vpop.f32.mrb[0].mxu0
          %v746 = vadd.f32 %v670, %v745
          %v747 = vpop.f32.mrb[0].mxu0
          %748 = vmatprep.mubr.f32.mxu0 0.0
          %749 = vmatmul.mubr.f32.gmra.mrb[0].mxu0 %v677
          %v750 = vpop.f32.mrb[0].mxu0
          %v751 = vadd.f32 %v670, %v750
          %v752 = vpop.f32.mrb[0].mxu0
          %753 = vdwg.mxu0
          %v754 = vld [vmem:[#allocation20] sm:$0xff]
          %v755 = vld [vmem:[#allocation20 + $0x8] sm:$0xff]
          %v756 = vld [vmem:[#allocation20 + $0x10] sm:$0xff]
          %v757 = vld [vmem:[#allocation20 + $0x18] sm:$0xff]
          %v758 = vld [vmem:[#allocation21] sm:$0x1]
          %v760 = vlaneseq
          %v761 = vshrl.u32 %v760, 7
          %v762 = vsub.s32 0, %v761
          %v763 = vrot.slane %v758, %v762
          %765 = vmatprep.subr.mxu0 0.0
          %766 = vmatpush1.msra.mxu0 %v754
          %767 = vmatprep.subr.mxu0 0.0
          %768 = vmatpush1.msra.mxu0 %v755
          %769 = vmatprep.subr.mxu0 0.0
          %770 = vmatpush1.msra.mxu0 %v756
          %771 = vmatprep.subr.mxu0 0.0
          %772 = vmatpush1.msra.mxu0 %v757
          %773 = vmatprep.subr.mxu0 0.0
          %774 = vmatpush1.msra.mxu0 0.0
          %775 = vmatprep.subr.mxu0 0.0
          %776 = vmatpush1.msra.mxu0 0.0
          %777 = vmatprep.subr.mxu0 0.0
          %778 = vmatpush1.msra.mxu0 0.0
          %779 = vmatprep.subr.mxu0 0.0
          %780 = vmatpush1.msra.mxu0 0.0
          %781 = vmatprep.subr.mxu0 0.0
          %782 = vmatpush1.msra.mxu0 0.0
          %783 = vmatprep.subr.mxu0 0.0
          %784 = vmatpush1.msra.mxu0 0.0
          %785 = vmatprep.subr.mxu0 0.0
          %786 = vmatpush1.msra.mxu0 0.0
          %787 = vmatprep.subr.mxu0 0.0
          %788 = vmatpush1.msra.mxu0 0.0
          %789 = vmatprep.subr.mxu0 0.0
          %790 = vmatpush1.msra.mxu0 0.0
          %791 = vmatprep.subr.mxu0 0.0
          %792 = vmatpush1.msra.mxu0 0.0
          %793 = vmatprep.subr.mxu0 0.0
          %794 = vmatpush1.msra.mxu0 0.0
          %795 = vmatprep.subr.mxu0 0.0
          %796 = vmatpush1.msra.mxu0 0.0
          %797 = vmatprep.subr.mxu0 0.0
          %798 = vmatpush1.msra.mxu0 0.0
          %799 = vmatprep.subr.mxu0 0.0
          %800 = vmatpush1.msra.mxu0 0.0
          %801 = vmatprep.subr.mxu0 0.0
          %802 = vmatpush1.msra.mxu0 0.0
          %803 = vmatprep.subr.mxu0 0.0
          %804 = vmatpush1.msra.mxu0 0.0
          %805 = vmatprep.subr.mxu0 0.0
          %806 = vmatpush1.msra.mxu0 0.0
          %807 = vmatprep.subr.mxu0 0.0
          %808 = vmatpush1.msra.mxu0 0.0
          %809 = vmatprep.subr.mxu0 0.0
          %810 = vmatpush1.msra.mxu0 0.0
          %811 = vmatprep.subr.mxu0 0.0
          %812 = vmatpush1.msra.mxu0 0.0
          %813 = vmatprep.subr.mxu0 0.0
          %814 = vmatpush1.msra.mxu0 0.0
          %815 = vmatprep.subr.mxu0 0.0
          %816 = vmatpush1.msra.mxu0 0.0
          %817 = vmatprep.subr.mxu0 0.0
          %818 = vmatpush1.msra.mxu0 0.0
          %819 = vmatprep.subr.mxu0 0.0
          %820 = vmatpush1.msra.mxu0 0.0
          %821 = vmatprep.subr.mxu0 0.0
          %822 = vmatpush1.msra.mxu0 0.0
          %823 = vmatprep.subr.mxu0 0.0
          %824 = vmatpush1.msra.mxu0 0.0
          %825 = vmatprep.subr.mxu0 0.0
          %826 = vmatpush1.msra.mxu0 0.0
          %827 = vmatprep.subr.mxu0 0.0
          %828 = vmatpush1.msra.mxu0 0.0
          %829 = vmatprep.mubr.f32.mxu0 0.0
          %830 = vmatmul.mubr.f32.gmra.mrb[0].mxu0 %v674
          %v831 = vpop.f32.mrb[0].mxu0
          %v832 = vadd.f32 %v763, %v831
          %v833 = vpop.f32.mrb[0].mxu0
          %834 = vmatprep.mubr.f32.mxu0 0.0
          %835 = vmatmul.mubr.f32.gmra.mrb[0].mxu0 %v677
          %v836 = vpop.f32.mrb[0].mxu0
          %v837 = vadd.f32 %v763, %v836
          %v838 = vpop.f32.mrb[0].mxu0
          %839 = vdwg.mxu0
          %v840 = vld [vmem:[#allocation12] sm:$0x1]
          %v842 = vlaneseq
          %v843 = vshrl.u32 %v842, 7
          %v844 = vsub.s32 0, %v843
          %v845 = vrot.slane %v840, %v844
          %v847 = vmul.f32 %v832, %v845
          %v848 = vmul.f32 %v837, %v845
          %849 = vxpose.xlu0.b32.start [1/16] %v746, 128
          %850 = vxpose.xlu0.b32.cont [2/16] %v751, 128
          %851 = vxpose.xlu0.b32.cont [3/16] 0.0, 128
          %852 = vxpose.xlu0.b32.cont [4/16] 0.0, 128
          %853 = vxpose.xlu0.b32.cont [5/16] 0.0, 128
          %854 = vxpose.xlu0.b32.cont [6/16] 0.0, 128
          %855 = vxpose.xlu0.b32.cont [7/16] 0.0, 128
          %856 = vxpose.xlu0.b32.cont [8/16] 0.0, 128
          %857 = vxpose.xlu0.b32.cont [9/16] 0.0, 128
          %858 = vxpose.xlu0.b32.cont [10/16] 0.0, 128
          %859 = vxpose.xlu0.b32.cont [11/16] 0.0, 128
          %860 = vxpose.xlu0.b32.cont [12/16] 0.0, 128
          %861 = vxpose.xlu0.b32.cont [13/16] 0.0, 128
          %862 = vxpose.xlu0.b32.cont [14/16] 0.0, 128
          %863 = vxpose.xlu0.b32.cont [15/16] 0.0, 128
          %864 = vxpose.xlu0.b32.end [16/16] 0.0, 128
          %v865 = vpop.trf.xlu0
          %v866 = vpop.trf.xlu0
          %v867 = vpop.trf.xlu0
          %v868 = vpop.trf.xlu0
          %v869 = vpop.trf.xlu0
          %v870 = vpop.trf.xlu0
          %v871 = vpop.trf.xlu0
          %v872 = vpop.trf.xlu0
          %v873 = vpop.trf.xlu0
          %v874 = vpop.trf.xlu0
          %v875 = vpop.trf.xlu0
          %v876 = vpop.trf.xlu0
          %v877 = vpop.trf.xlu0
          %v878 = vpop.trf.xlu0
          %v879 = vpop.trf.xlu0
          %v880 = vpop.trf.xlu0
          %vm881 = vcmask 130048
          %882 = vst.msk [vmem:[#allocation2] sm:$0xff] %vm881, %v865
          %883 = vst.msk [vmem:[#allocation2 + $0x8] sm:$0xff] %vm881, %v866
          %884 = vst.msk [vmem:[#allocation2 + $0x10] sm:$0xff] %vm881, %v867
          %885 = vst.msk [vmem:[#allocation2 + $0x18] sm:$0xff] %vm881, %v868
          %888 = vrot.lane.b32.xlu0 %v847, 120
          %v889 = vpop.permute.xlu0 %888
          %890 = vrot.lane.b32.xlu0 %v848, 120
          %v891 = vpop.permute.xlu0 %890
          %894 = vrot.lane.b32.xlu0 %v847, 112
          %v895 = vpop.permute.xlu0 %894
          %896 = vrot.lane.b32.xlu0 %v848, 112
          %v897 = vpop.permute.xlu0 %896
          %900 = vrot.lane.b32.xlu0 %v847, 104
          %v901 = vpop.permute.xlu0 %900
          %902 = vrot.lane.b32.xlu0 %v848, 104
          %v903 = vpop.permute.xlu0 %902
          %v906 = vcombine.low %v847, %v895
          %v907 = vcombine.high %v847, %v895
          %v909 = vunpack.c.l.s4 1983009808
          %v910 = vunpack.c.0.s8 %v909
          %v911 = vlaneseq
          %v912 = vshrl.u32 %v911, 7
          %v913 = vsub.s32 %v910, %v912
          %v914 = vrot.slane %v906, %v913
          %v916 = vunpack.c.l.s4 1983009808
          %v917 = vunpack.c.0.s8 %v916
          %v918 = vlaneseq
          %v919 = vshrl.u32 %v918, 7
          %v920 = vsub.s32 %v917, %v919
          %v921 = vrot.slane %v907, %v920
          %v922 = vcombine.low %v889, %v901
          %v923 = vcombine.high %v889, %v901
          %v925 = vunpack.c.l.s4 1983009808
          %v926 = vunpack.c.0.s8 %v925
          %v927 = vlaneseq
          %v928 = vshrl.u32 %v927, 7
          %v929 = vsub.s32 %v926, %v928
          %v930 = vrot.slane %v922, %v929
          %v932 = vunpack.c.l.s4 1983009808
          %v933 = vunpack.c.0.s8 %v932
          %v934 = vlaneseq
          %v935 = vshrl.u32 %v934, 7
          %v936 = vsub.s32 %v933, %v935
          %v937 = vrot.slane %v923, %v936
          %v938 = vcombine.low %v914, %v930
          %v939 = vcombine.high %v914, %v930
          %v941 = vunpack.c.l.s4 1934713408
          %v942 = vunpack.c.0.s8 %v941
          %v943 = vlaneseq
          %v944 = vshrl.u32 %v943, 7
          %v945 = vsub.s32 %v942, %v944
          %v946 = vrot.slane %v938, %v945
          %v948 = vunpack.c.l.s4 1934713408
          %v949 = vunpack.c.0.s8 %v948
          %v950 = vlaneseq
          %v951 = vshrl.u32 %v950, 7
          %v952 = vsub.s32 %v949, %v951
          %v953 = vrot.slane %v939, %v952
          %v954 = vcombine.low %v921, %v937
          %v955 = vcombine.high %v921, %v937
          %v957 = vunpack.c.l.s4 1934713408
          %v958 = vunpack.c.0.s8 %v957
          %v959 = vlaneseq
          %v960 = vshrl.u32 %v959, 7
          %v961 = vsub.s32 %v958, %v960
          %v962 = vrot.slane %v954, %v961
          %v964 = vunpack.c.l.s4 1934713408
          %v965 = vunpack.c.0.s8 %v964
          %v966 = vlaneseq
          %v967 = vshrl.u32 %v966, 7
          %v968 = vsub.s32 %v965, %v967
          %v969 = vrot.slane %v955, %v968
          %v970 = vcombine.high %v946, 0.0
          %v971 = vcombine.high %v953, 0.0
          %v972 = vcombine.high %v962, 0.0
          %v973 = vcombine.high %v969, 0.0
          %v974 = vcombine.low %v848, %v897
          %v975 = vcombine.high %v848, %v897
          %v977 = vunpack.c.l.s4 1983009808
          %v978 = vunpack.c.0.s8 %v977
          %v979 = vlaneseq
          %v980 = vshrl.u32 %v979, 7
          %v981 = vsub.s32 %v978, %v980
          %v982 = vrot.slane %v974, %v981
          %v984 = vunpack.c.l.s4 1983009808
          %v985 = vunpack.c.0.s8 %v984
          %v986 = vlaneseq
          %v987 = vshrl.u32 %v986, 7
          %v988 = vsub.s32 %v985, %v987
          %v989 = vrot.slane %v975, %v988
          %v990 = vcombine.low %v891, %v903
          %v991 = vcombine.high %v891, %v903
          %v993 = vunpack.c.l.s4 1983009808
          %v994 = vunpack.c.0.s8 %v993
          %v995 = vlaneseq
          %v996 = vshrl.u32 %v995, 7
          %v997 = vsub.s32 %v994, %v996
          %v998 = vrot.slane %v990, %v997
          %v1000 = vunpack.c.l.s4 1983009808
          %v1001 = vunpack.c.0.s8 %v1000
          %v1002 = vlaneseq
          %v1003 = vshrl.u32 %v1002, 7
          %v1004 = vsub.s32 %v1001, %v1003
          %v1005 = vrot.slane %v991, %v1004
          %v1006 = vcombine.low %v982, %v998
          %v1007 = vcombine.high %v982, %v998
          %v1009 = vunpack.c.l.s4 1934713408
          %v1010 = vunpack.c.0.s8 %v1009
          %v1011 = vlaneseq
          %v1012 = vshrl.u32 %v1011, 7
          %v1013 = vsub.s32 %v1010, %v1012
          %v1014 = vrot.slane %v1006, %v1013
          %v1016 = vunpack.c.l.s4 1934713408
          %v1017 = vunpack.c.0.s8 %v1016
          %v1018 = vlaneseq
          %v1019 = vshrl.u32 %v1018, 7
          %v1020 = vsub.s32 %v1017, %v1019
          %v1021 = vrot.slane %v1007, %v1020
          %v1022 = vcombine.low %v989, %v1005
          %v1023 = vcombine.high %v989, %v1005
          %v1025 = vunpack.c.l.s4 1934713408
          %v1026 = vunpack.c.0.s8 %v1025
          %v1027 = vlaneseq
          %v1028 = vshrl.u32 %v1027, 7
          %v1029 = vsub.s32 %v1026, %v1028
          %v1030 = vrot.slane %v1022, %v1029
          %v1032 = vunpack.c.l.s4 1934713408
          %v1033 = vunpack.c.0.s8 %v1032
          %v1034 = vlaneseq
          %v1035 = vshrl.u32 %v1034, 7
          %v1036 = vsub.s32 %v1033, %v1035
          %v1037 = vrot.slane %v1023, %v1036
          %v1038 = vcombine.high %v1014, 0.0
          %v1039 = vcombine.high %v1021, 0.0
          %v1040 = vcombine.high %v1030, 0.0
          %v1041 = vcombine.high %v1037, 0.0
          %v1042 = vcombine.low %v946, %v953
          %v1044 = vunpack.c.l.s4 1983009808
          %v1045 = vunpack.c.0.s8 %v1044
          %v1046 = vlaneseq
          %v1047 = vshrl.u32 %v1046, 7
          %v1048 = vsub.s32 %v1045, %v1047
          %v1049 = vrot.slane %v1042, %v1048
          %v1050 = vcombine.low %v970, %v971
          %v1052 = vunpack.c.l.s4 1983009808
          %v1053 = vunpack.c.0.s8 %v1052
          %v1054 = vlaneseq
          %v1055 = vshrl.u32 %v1054, 7
          %v1056 = vsub.s32 %v1053, %v1055
          %v1057 = vrot.slane %v1050, %v1056
          %v1058 = vcombine.low %v962, %v969
          %v1060 = vunpack.c.l.s4 1983009808
          %v1061 = vunpack.c.0.s8 %v1060
          %v1062 = vlaneseq
          %v1063 = vshrl.u32 %v1062, 7
          %v1064 = vsub.s32 %v1061, %v1063
          %v1065 = vrot.slane %v1058, %v1064
          %v1066 = vcombine.low %v972, %v973
          %v1068 = vunpack.c.l.s4 1983009808
          %v1069 = vunpack.c.0.s8 %v1068
          %v1070 = vlaneseq
          %v1071 = vshrl.u32 %v1070, 7
          %v1072 = vsub.s32 %v1069, %v1071
          %v1073 = vrot.slane %v1066, %v1072
          %v1074 = vcombine.low %v1049, %v1057
          %v1075 = vcombine.high %v1049, %v1057
          %v1077 = vunpack.c.l.s4 1934713408
          %v1078 = vunpack.c.0.s8 %v1077
          %v1079 = vlaneseq
          %v1080 = vshrl.u32 %v1079, 7
          %v1081 = vsub.s32 %v1078, %v1080
          %v1082 = vrot.slane %v1074, %v1081
          %v1084 = vunpack.c.l.s4 1934713408
          %v1085 = vunpack.c.0.s8 %v1084
          %v1086 = vlaneseq
          %v1087 = vshrl.u32 %v1086, 7
          %v1088 = vsub.s32 %v1085, %v1087
          %v1089 = vrot.slane %v1075, %v1088
          %v1090 = vcombine.low %v1065, %v1073
          %v1091 = vcombine.high %v1065, %v1073
          %v1093 = vunpack.c.l.s4 1934713408
          %v1094 = vunpack.c.0.s8 %v1093
          %v1095 = vlaneseq
          %v1096 = vshrl.u32 %v1095, 7
          %v1097 = vsub.s32 %v1094, %v1096
          %v1098 = vrot.slane %v1090, %v1097
          %v1100 = vunpack.c.l.s4 1934713408
          %v1101 = vunpack.c.0.s8 %v1100
          %v1102 = vlaneseq
          %v1103 = vshrl.u32 %v1102, 7
          %v1104 = vsub.s32 %v1101, %v1103
          %v1105 = vrot.slane %v1091, %v1104
          %v1106 = vcombine.low %v1082, %v1098
          %v1107 = vcombine.high %v1082, %v1098
          %v1108 = vcombine.low %v1089, %v1105
          %v1109 = vcombine.high %v1089, %v1105
          %v1110 = vcombine.low %v1014, %v1021
          %v1112 = vunpack.c.l.s4 1983009808
          %v1113 = vunpack.c.0.s8 %v1112
          %v1114 = vlaneseq
          %v1115 = vshrl.u32 %v1114, 7
          %v1116 = vsub.s32 %v1113, %v1115
          %v1117 = vrot.slane %v1110, %v1116
          %v1118 = vcombine.low %v1038, %v1039
          %v1120 = vunpack.c.l.s4 1983009808
          %v1121 = vunpack.c.0.s8 %v1120
          %v1122 = vlaneseq
          %v1123 = vshrl.u32 %v1122, 7
          %v1124 = vsub.s32 %v1121, %v1123
          %v1125 = vrot.slane %v1118, %v1124
          %v1126 = vcombine.low %v1030, %v1037
          %v1128 = vunpack.c.l.s4 1983009808
          %v1129 = vunpack.c.0.s8 %v1128
          %v1130 = vlaneseq
          %v1131 = vshrl.u32 %v1130, 7
          %v1132 = vsub.s32 %v1129, %v1131
          %v1133 = vrot.slane %v1126, %v1132
          %v1134 = vcombine.low %v1040, %v1041
          %v1136 = vunpack.c.l.s4 1983009808
          %v1137 = vunpack.c.0.s8 %v1136
          %v1138 = vlaneseq
          %v1139 = vshrl.u32 %v1138, 7
          %v1140 = vsub.s32 %v1137, %v1139
          %v1141 = vrot.slane %v1134, %v1140
          %v1142 = vcombine.low %v1117, %v1125
          %v1143 = vcombine.high %v1117, %v1125
          %v1145 = vunpack.c.l.s4 1934713408
          %v1146 = vunpack.c.0.s8 %v1145
          %v1147 = vlaneseq
          %v1148 = vshrl.u32 %v1147, 7
          %v1149 = vsub.s32 %v1146, %v1148
          %v1150 = vrot.slane %v1142, %v1149
          %v1152 = vunpack.c.l.s4 1934713408
          %v1153 = vunpack.c.0.s8 %v1152
          %v1154 = vlaneseq
          %v1155 = vshrl.u32 %v1154, 7
          %v1156 = vsub.s32 %v1153, %v1155
          %v1157 = vrot.slane %v1143, %v1156
          %v1158 = vcombine.low %v1133, %v1141
          %v1159 = vcombine.high %v1133, %v1141
          %v1161 = vunpack.c.l.s4 1934713408
          %v1162 = vunpack.c.0.s8 %v1161
          %v1163 = vlaneseq
          %v1164 = vshrl.u32 %v1163, 7
          %v1165 = vsub.s32 %v1162, %v1164
          %v1166 = vrot.slane %v1158, %v1165
          %v1168 = vunpack.c.l.s4 1934713408
          %v1169 = vunpack.c.0.s8 %v1168
          %v1170 = vlaneseq
          %v1171 = vshrl.u32 %v1170, 7
          %v1172 = vsub.s32 %v1169, %v1171
          %v1173 = vrot.slane %v1159, %v1172
          %v1174 = vcombine.low %v1150, %v1166
          %v1175 = vcombine.high %v1150, %v1166
          %v1176 = vcombine.low %v1157, %v1173
          %v1177 = vcombine.high %v1157, %v1173
          %vm1178 = vcmask 64512
          %1179 = vst.msk [vmem:[#allocation3] sm:$0xff] %vm1178, %v1106
          %1180 = vst.msk [vmem:[#allocation3 + $0x8] sm:$0xff] %vm1178, %v1174
          %1181 = vst.msk [vmem:[#allocation3 + $0x10] sm:$0xff] %vm1178, %v1107
          %1182 = vst.msk [vmem:[#allocation3 + $0x18] sm:$0xff] %vm1178, %v1175
          %1183 = vst.msk [vmem:[#allocation3 + $0x20] sm:$0xff] %vm1178, %v1108
          %1184 = vst.msk [vmem:[#allocation3 + $0x28] sm:$0xff] %vm1178, %v1176
          %1185 = vst.msk [vmem:[#allocation3 + $0x30] sm:$0xff] %vm1178, %v1109
          %1186 = vst.msk [vmem:[#allocation3 + $0x38] sm:$0xff] %vm1178, %v1177
        $region120: #{tpu_custom_call.1} parent=67 // pred_fallthru
          _
        %v1187 = vld [vmem:[%s547] sm:$0xff]
        %v1188 = vld [vmem:[%s547 + $0x8] sm:$0xff]
        %v1189 = vld [vmem:[#allocation14] sm:$0xff]
        %v1190 = vld [vmem:[#allocation14 + $0x8] sm:$0xff]
        %v1191 = vld [vmem:[#allocation14 + $0x10] sm:$0xff]
        %v1192 = vld [vmem:[#allocation14 + $0x18] sm:$0xff]
        %v1193 = vld [vmem:[#allocation15] sm:$0x1]
        %v1195 = vlaneseq
        %v1196 = vshrl.u32 %v1195, 7
        %v1197 = vsub.s32 0, %v1196
        %v1198 = vrot.slane %v1193, %v1197
        %vm1200 = vcmask 261120
        %v1202 = vsel %vm1200, %v1187, 0
        %v1205 = vsel %vm1200, %v1188, 0
        %1207 = vmatprep.subr.mxu0 0.0
        %1208 = vmatpush1.msra.mxu0 %v1189
        %1209 = vmatprep.subr.mxu0 0.0
        %1210 = vmatpush1.msra.mxu0 %v1190
        %1211 = vmatprep.subr.mxu0 0.0
        %1212 = vmatpush1.msra.mxu0 %v1191
        %1213 = vmatprep.subr.mxu0 0.0
        %1214 = vmatpush1.msra.mxu0 %v1192
        %1215 = vmatprep.subr.mxu0 0.0
        %1216 = vmatpush1.msra.mxu0 0.0
        %1217 = vmatprep.subr.mxu0 0.0
        %1218 = vmatpush1.msra.mxu0 0.0
        %1219 = vmatprep.subr.mxu0 0.0
        %1220 = vmatpush1.msra.mxu0 0.0
        %1221 = vmatprep.subr.mxu0 0.0
        %1222 = vmatpush1.msra.mxu0 0.0
        %1223 = vmatprep.subr.mxu0 0.0
        %1224 = vmatpush1.msra.mxu0 0.0
        %1225 = vmatprep.subr.mxu0 0.0
        %1226 = vmatpush1.msra.mxu0 0.0
        %1227 = vmatprep.subr.mxu0 0.0
        %1228 = vmatpush1.msra.mxu0 0.0
        %1229 = vmatprep.subr.mxu0 0.0
        %1230 = vmatpush1.msra.mxu0 0.0
        %1231 = vmatprep.subr.mxu0 0.0
        %1232 = vmatpush1.msra.mxu0 0.0
        %1233 = vmatprep.subr.mxu0 0.0
        %1234 = vmatpush1.msra.mxu0 0.0
        %1235 = vmatprep.subr.mxu0 0.0
        %1236 = vmatpush1.msra.mxu0 0.0
        %1237 = vmatprep.subr.mxu0 0.0
        %1238 = vmatpush1.msra.mxu0 0.0
        %1239 = vmatprep.subr.mxu0 0.0
        %1240 = vmatpush1.msra.mxu0 0.0
        %1241 = vmatprep.subr.mxu0 0.0
        %1242 = vmatpush1.msra.mxu0 0.0
        %1243 = vmatprep.subr.mxu0 0.0
        %1244 = vmatpush1.msra.mxu0 0.0
        %1245 = vmatprep.subr.mxu0 0.0
        %1246 = vmatpush1.msra.mxu0 0.0
        %1247 = vmatprep.subr.mxu0 0.0
        %1248 = vmatpush1.msra.mxu0 0.0
        %1249 = vmatprep.subr.mxu0 0.0
        %1250 = vmatpush1.msra.mxu0 0.0
        %1251 = vmatprep.subr.mxu0 0.0
        %1252 = vmatpush1.msra.mxu0 0.0
        %1253 = vmatprep.subr.mxu0 0.0
        %1254 = vmatpush1.msra.mxu0 0.0
        %1255 = vmatprep.subr.mxu0 0.0
        %1256 = vmatpush1.msra.mxu0 0.0
        %1257 = vmatprep.subr.mxu0 0.0
        %1258 = vmatpush1.msra.mxu0 0.0
        %1259 = vmatprep.subr.mxu0 0.0
        %1260 = vmatpush1.msra.mxu0 0.0
        %1261 = vmatprep.subr.mxu0 0.0
        %1262 = vmatpush1.msra.mxu0 0.0
        %1263 = vmatprep.subr.mxu0 0.0
        %1264 = vmatpush1.msra.mxu0 0.0
        %1265 = vmatprep.subr.mxu0 0.0
        %1266 = vmatpush1.msra.mxu0 0.0
        %1267 = vmatprep.subr.mxu0 0.0
        %1268 = vmatpush1.msra.mxu0 0.0
        %1269 = vmatprep.subr.mxu0 0.0
        %1270 = vmatpush1.msra.mxu0 0.0
        %1271 = vmatprep.mubr.f32.mxu0 0.0
        %1272 = vmatmul.mubr.f32.gmra.mrb[0].mxu0 %v1202
        %v1273 = vpop.f32.mrb[0].mxu0
        %v1274 = vadd.f32 %v1198, %v1273
        %v1275 = vpop.f32.mrb[0].mxu0
        %1276 = vmatprep.mubr.f32.mxu0 0.0
        %1277 = vmatmul.mubr.f32.gmra.mrb[0].mxu0 %v1205
        %v1278 = vpop.f32.mrb[0].mxu0
        %v1279 = vadd.f32 %v1198, %v1278
        %v1280 = vpop.f32.mrb[0].mxu0
        %1281 = vdwg.mxu0
        %v1282 = vmul.f32 %v1274, 0.35355338
        %v1283 = vmul.f32 %v1279, 0.35355338
        %1286 = vrot.lane.b32.xlu0 %v1282, 120
        %v1287 = vpop.permute.xlu0 %1286
        %1288 = vrot.lane.b32.xlu0 %v1283, 120
        %v1289 = vpop.permute.xlu0 %1288
        %1292 = vrot.lane.b32.xlu0 %v1282, 112
        %v1293 = vpop.permute.xlu0 %1292
        %1294 = vrot.lane.b32.xlu0 %v1283, 112
        %v1295 = vpop.permute.xlu0 %1294
        %1298 = vrot.lane.b32.xlu0 %v1282, 104
        %v1299 = vpop.permute.xlu0 %1298
        %1300 = vrot.lane.b32.xlu0 %v1283, 104
        %v1301 = vpop.permute.xlu0 %1300
        %v1304 = vcombine.low %v1282, %v1293
        %v1305 = vcombine.high %v1282, %v1293
        %v1307 = vunpack.c.l.s4 1983009808
        %v1308 = vunpack.c.0.s8 %v1307
        %v1309 = vlaneseq
        %v1310 = vshrl.u32 %v1309, 7
        %v1311 = vsub.s32 %v1308, %v1310
        %v1312 = vrot.slane %v1304, %v1311
        %v1314 = vunpack.c.l.s4 1983009808
        %v1315 = vunpack.c.0.s8 %v1314
        %v1316 = vlaneseq
        %v1317 = vshrl.u32 %v1316, 7
        %v1318 = vsub.s32 %v1315, %v1317
        %v1319 = vrot.slane %v1305, %v1318
        %v1320 = vcombine.low %v1287, %v1299
        %v1321 = vcombine.high %v1287, %v1299
        %v1323 = vunpack.c.l.s4 1983009808
        %v1324 = vunpack.c.0.s8 %v1323
        %v1325 = vlaneseq
        %v1326 = vshrl.u32 %v1325, 7
        %v1327 = vsub.s32 %v1324, %v1326
        %v1328 = vrot.slane %v1320, %v1327
        %v1330 = vunpack.c.l.s4 1983009808
        %v1331 = vunpack.c.0.s8 %v1330
        %v1332 = vlaneseq
        %v1333 = vshrl.u32 %v1332, 7
        %v1334 = vsub.s32 %v1331, %v1333
        %v1335 = vrot.slane %v1321, %v1334
        %v1336 = vcombine.low %v1312, %v1328
        %v1337 = vcombine.high %v1312, %v1328
        %v1339 = vunpack.c.l.s4 1934713408
        %v1340 = vunpack.c.0.s8 %v1339
        %v1341 = vlaneseq
        %v1342 = vshrl.u32 %v1341, 7
        %v1343 = vsub.s32 %v1340, %v1342
        %v1344 = vrot.slane %v1336, %v1343
        %v1346 = vunpack.c.l.s4 1934713408
        %v1347 = vunpack.c.0.s8 %v1346
        %v1348 = vlaneseq
        %v1349 = vshrl.u32 %v1348, 7
        %v1350 = vsub.s32 %v1347, %v1349
        %v1351 = vrot.slane %v1337, %v1350
        %v1352 = vcombine.low %v1319, %v1335
        %v1353 = vcombine.high %v1319, %v1335
        %v1355 = vunpack.c.l.s4 1934713408
        %v1356 = vunpack.c.0.s8 %v1355
        %v1357 = vlaneseq
        %v1358 = vshrl.u32 %v1357, 7
        %v1359 = vsub.s32 %v1356, %v1358
        %v1360 = vrot.slane %v1352, %v1359
        %v1362 = vunpack.c.l.s4 1934713408
        %v1363 = vunpack.c.0.s8 %v1362
        %v1364 = vlaneseq
        %v1365 = vshrl.u32 %v1364, 7
        %v1366 = vsub.s32 %v1363, %v1365
        %v1367 = vrot.slane %v1353, %v1366
        %v1368 = vcombine.high %v1344, 0.0
        %v1369 = vcombine.high %v1351, 0.0
        %v1370 = vcombine.high %v1360, 0.0
        %v1371 = vcombine.high %v1367, 0.0
        %v1372 = vcombine.low %v1283, %v1295
        %v1373 = vcombine.high %v1283, %v1295
        %v1375 = vunpack.c.l.s4 1983009808
        %v1376 = vunpack.c.0.s8 %v1375
        %v1377 = vlaneseq
        %v1378 = vshrl.u32 %v1377, 7
        %v1379 = vsub.s32 %v1376, %v1378
        %v1380 = vrot.slane %v1372, %v1379
        %v1382 = vunpack.c.l.s4 1983009808
        %v1383 = vunpack.c.0.s8 %v1382
        %v1384 = vlaneseq
        %v1385 = vshrl.u32 %v1384, 7
        %v1386 = vsub.s32 %v1383, %v1385
        %v1387 = vrot.slane %v1373, %v1386
        %v1388 = vcombine.low %v1289, %v1301
        %v1389 = vcombine.high %v1289, %v1301
        %v1391 = vunpack.c.l.s4 1983009808
        %v1392 = vunpack.c.0.s8 %v1391
        %v1393 = vlaneseq
        %v1394 = vshrl.u32 %v1393, 7
        %v1395 = vsub.s32 %v1392, %v1394
        %v1396 = vrot.slane %v1388, %v1395
        %v1398 = vunpack.c.l.s4 1983009808
        %v1399 = vunpack.c.0.s8 %v1398
        %v1400 = vlaneseq
        %v1401 = vshrl.u32 %v1400, 7
        %v1402 = vsub.s32 %v1399, %v1401
        %v1403 = vrot.slane %v1389, %v1402
        %v1404 = vcombine.low %v1380, %v1396
        %v1405 = vcombine.high %v1380, %v1396
        %v1407 = vunpack.c.l.s4 1934713408
        %v1408 = vunpack.c.0.s8 %v1407
        %v1409 = vlaneseq
        %v1410 = vshrl.u32 %v1409, 7
        %v1411 = vsub.s32 %v1408, %v1410
        %v1412 = vrot.slane %v1404, %v1411
        %v1414 = vunpack.c.l.s4 1934713408
        %v1415 = vunpack.c.0.s8 %v1414
        %v1416 = vlaneseq
        %v1417 = vshrl.u32 %v1416, 7
        %v1418 = vsub.s32 %v1415, %v1417
        %v1419 = vrot.slane %v1405, %v1418
        %v1420 = vcombine.low %v1387, %v1403
        %v1421 = vcombine.high %v1387, %v1403
        %v1423 = vunpack.c.l.s4 1934713408
        %v1424 = vunpack.c.0.s8 %v1423
        %v1425 = vlaneseq
        %v1426 = vshrl.u32 %v1425, 7
        %v1427 = vsub.s32 %v1424, %v1426
        %v1428 = vrot.slane %v1420, %v1427
        %v1430 = vunpack.c.l.s4 1934713408
        %v1431 = vunpack.c.0.s8 %v1430
        %v1432 = vlaneseq
        %v1433 = vshrl.u32 %v1432, 7
        %v1434 = vsub.s32 %v1431, %v1433
        %v1435 = vrot.slane %v1421, %v1434
        %v1436 = vcombine.high %v1412, 0.0
        %v1437 = vcombine.high %v1419, 0.0
        %v1438 = vcombine.high %v1428, 0.0
        %v1439 = vcombine.high %v1435, 0.0
        %v1440 = vcombine.low %v1344, %v1351
        %v1442 = vunpack.c.l.s4 1983009808
        %v1443 = vunpack.c.0.s8 %v1442
        %v1444 = vlaneseq
        %v1445 = vshrl.u32 %v1444, 7
        %v1446 = vsub.s32 %v1443, %v1445
        %v1447 = vrot.slane %v1440, %v1446
        %v1448 = vcombine.low %v1368, %v1369
        %v1450 = vunpack.c.l.s4 1983009808
        %v1451 = vunpack.c.0.s8 %v1450
        %v1452 = vlaneseq
        %v1453 = vshrl.u32 %v1452, 7
        %v1454 = vsub.s32 %v1451, %v1453
        %v1455 = vrot.slane %v1448, %v1454
        %v1456 = vcombine.low %v1360, %v1367
        %v1458 = vunpack.c.l.s4 1983009808
        %v1459 = vunpack.c.0.s8 %v1458
        %v1460 = vlaneseq
        %v1461 = vshrl.u32 %v1460, 7
        %v1462 = vsub.s32 %v1459, %v1461
        %v1463 = vrot.slane %v1456, %v1462
        %v1464 = vcombine.low %v1370, %v1371
        %v1466 = vunpack.c.l.s4 1983009808
        %v1467 = vunpack.c.0.s8 %v1466
        %v1468 = vlaneseq
        %v1469 = vshrl.u32 %v1468, 7
        %v1470 = vsub.s32 %v1467, %v1469
        %v1471 = vrot.slane %v1464, %v1470
        %v1472 = vcombine.low %v1447, %v1455
        %v1473 = vcombine.high %v1447, %v1455
        %v1475 = vunpack.c.l.s4 1934713408
        %v1476 = vunpack.c.0.s8 %v1475
        %v1477 = vlaneseq
        %v1478 = vshrl.u32 %v1477, 7
        %v1479 = vsub.s32 %v1476, %v1478
        %v1480 = vrot.slane %v1472, %v1479
        %v1482 = vunpack.c.l.s4 1934713408
        %v1483 = vunpack.c.0.s8 %v1482
        %v1484 = vlaneseq
        %v1485 = vshrl.u32 %v1484, 7
        %v1486 = vsub.s32 %v1483, %v1485
        %v1487 = vrot.slane %v1473, %v1486
        %v1488 = vcombine.low %v1463, %v1471
        %v1489 = vcombine.high %v1463, %v1471
        %v1491 = vunpack.c.l.s4 1934713408
        %v1492 = vunpack.c.0.s8 %v1491
        %v1493 = vlaneseq
        %v1494 = vshrl.u32 %v1493, 7
        %v1495 = vsub.s32 %v1492, %v1494
        %v1496 = vrot.slane %v1488, %v1495
        %v1498 = vunpack.c.l.s4 1934713408
        %v1499 = vunpack.c.0.s8 %v1498
        %v1500 = vlaneseq
        %v1501 = vshrl.u32 %v1500, 7
        %v1502 = vsub.s32 %v1499, %v1501
        %v1503 = vrot.slane %v1489, %v1502
        %v1504 = vcombine.low %v1480, %v1496
        %v1505 = vcombine.high %v1480, %v1496
        %v1506 = vcombine.low %v1487, %v1503
        %v1507 = vcombine.high %v1487, %v1503
        %v1508 = vcombine.low %v1412, %v1419
        %v1510 = vunpack.c.l.s4 1983009808
        %v1511 = vunpack.c.0.s8 %v1510
        %v1512 = vlaneseq
        %v1513 = vshrl.u32 %v1512, 7
        %v1514 = vsub.s32 %v1511, %v1513
        %v1515 = vrot.slane %v1508, %v1514
        %v1516 = vcombine.low %v1436, %v1437
        %v1518 = vunpack.c.l.s4 1983009808
        %v1519 = vunpack.c.0.s8 %v1518
        %v1520 = vlaneseq
        %v1521 = vshrl.u32 %v1520, 7
        %v1522 = vsub.s32 %v1519, %v1521
        %v1523 = vrot.slane %v1516, %v1522
        %v1524 = vcombine.low %v1428, %v1435
        %v1526 = vunpack.c.l.s4 1983009808
        %v1527 = vunpack.c.0.s8 %v1526
        %v1528 = vlaneseq
        %v1529 = vshrl.u32 %v1528, 7
        %v1530 = vsub.s32 %v1527, %v1529
        %v1531 = vrot.slane %v1524, %v1530
        %v1532 = vcombine.low %v1438, %v1439
        %v1534 = vunpack.c.l.s4 1983009808
        %v1535 = vunpack.c.0.s8 %v1534
        %v1536 = vlaneseq
        %v1537 = vshrl.u32 %v1536, 7
        %v1538 = vsub.s32 %v1535, %v1537
        %v1539 = vrot.slane %v1532, %v1538
        %v1540 = vcombine.low %v1515, %v1523
        %v1541 = vcombine.high %v1515, %v1523
        %v1543 = vunpack.c.l.s4 1934713408
        %v1544 = vunpack.c.0.s8 %v1543
        %v1545 = vlaneseq
        %v1546 = vshrl.u32 %v1545, 7
        %v1547 = vsub.s32 %v1544, %v1546
        %v1548 = vrot.slane %v1540, %v1547
        %v1550 = vunpack.c.l.s4 1934713408
        %v1551 = vunpack.c.0.s8 %v1550
        %v1552 = vlaneseq
        %v1553 = vshrl.u32 %v1552, 7
        %v1554 = vsub.s32 %v1551, %v1553
        %v1555 = vrot.slane %v1541, %v1554
        %v1556 = vcombine.low %v1531, %v1539
        %v1557 = vcombine.high %v1531, %v1539
        %v1559 = vunpack.c.l.s4 1934713408
        %v1560 = vunpack.c.0.s8 %v1559
        %v1561 = vlaneseq
        %v1562 = vshrl.u32 %v1561, 7
        %v1563 = vsub.s32 %v1560, %v1562
        %v1564 = vrot.slane %v1556, %v1563
        %v1566 = vunpack.c.l.s4 1934713408
        %v1567 = vunpack.c.0.s8 %v1566
        %v1568 = vlaneseq
        %v1569 = vshrl.u32 %v1568, 7
        %v1570 = vsub.s32 %v1567, %v1569
        %v1571 = vrot.slane %v1557, %v1570
        %v1572 = vcombine.low %v1548, %v1564
        %v1573 = vcombine.high %v1548, %v1564
        %v1574 = vcombine.low %v1555, %v1571
        %v1575 = vcombine.high %v1555, %v1571
        %vm1576 = vcmask 64512
        %1577 = vst.msk [vmem:[#allocation4] sm:$0xff] %vm1576, %v1504
        %1578 = vst.msk [vmem:[#allocation4 + $0x8] sm:$0xff] %vm1576, %v1572
        %1579 = vst.msk [vmem:[#allocation4 + $0x10] sm:$0xff] %vm1576, %v1505
        %1580 = vst.msk [vmem:[#allocation4 + $0x18] sm:$0xff] %vm1576, %v1573
        %1581 = vst.msk [vmem:[#allocation4 + $0x20] sm:$0xff] %vm1576, %v1506
        %1582 = vst.msk [vmem:[#allocation4 + $0x28] sm:$0xff] %vm1576, %v1574
        %1583 = vst.msk [vmem:[#allocation4 + $0x30] sm:$0xff] %vm1576, %v1507
        %1584 = vst.msk [vmem:[#allocation4 + $0x38] sm:$0xff] %vm1576, %v1575
        %v1585 = vld [vmem:[%s565] sm:$0xff]
        %v1586 = vld [vmem:[%s565 + $0x8] sm:$0xff]
        %s1587 = smul.u32 0, 16
        %s1588 = scalar_lea.vmem [#allocation4], %s1587
        %v1589 = vld [vmem:[%s1588] sm:$0xff]
        %v1590 = vld [vmem:[%s1588 + $0x8] sm:$0xff]
        %v1591 = vld [vmem:[%s1588 + $0x10] sm:$0xff]
        %v1592 = vld [vmem:[%s1588 + $0x18] sm:$0xff]
        %v1593 = vld [vmem:[%s1588 + $0x20] sm:$0xff]
        %v1594 = vld [vmem:[%s1588 + $0x28] sm:$0xff]
        %v1595 = vld [vmem:[%s1588 + $0x30] sm:$0xff]
        %v1596 = vld [vmem:[%s1588 + $0x38] sm:$0xff]
        %s1597 = smul.u32 0, 8
        %s1598 = scalar_lea.vmem [#allocation2], %s1597
        %v1599 = vld [vmem:[%s1598] sm:$0xff]
        %v1600 = vld [vmem:[%s1598 + $0x8] sm:$0xff]
        %v1601 = vld [vmem:[%s1598 + $0x10] sm:$0xff]
        %v1602 = vld [vmem:[%s1598 + $0x18] sm:$0xff]
        %s1603 = scalar_lea.vmem [#allocation3], %s1587
        %v1604 = vld [vmem:[%s1603] sm:$0xff]
        %v1605 = vld [vmem:[%s1603 + $0x8] sm:$0xff]
        %v1606 = vld [vmem:[%s1603 + $0x10] sm:$0xff]
        %v1607 = vld [vmem:[%s1603 + $0x18] sm:$0xff]
        %v1608 = vld [vmem:[%s1603 + $0x20] sm:$0xff]
        %v1609 = vld [vmem:[%s1603 + $0x28] sm:$0xff]
        %v1610 = vld [vmem:[%s1603 + $0x30] sm:$0xff]
        %v1611 = vld [vmem:[%s1603 + $0x38] sm:$0xff]
        %v1613 = vsel %vm1576, %v1589, 0
        %v1616 = vsel %vm1576, %v1590, 0
        %1618 = vmatprep.subr.mxu0 0.0
        %1619 = vmatpush1.msra.mxu0 %v1599
        %1620 = vmatprep.subr.mxu0 0.0
        %1621 = vmatpush1.msra.mxu0 0.0
        %1622 = vmatprep.subr.mxu0 0.0
        %1623 = vmatpush1.msra.mxu0 0.0
        %1624 = vmatprep.subr.mxu0 0.0
        %1625 = vmatpush1.msra.mxu0 0.0
        %1626 = vmatprep.subr.mxu0 0.0
        %1627 = vmatpush1.msra.mxu0 0.0
        %1628 = vmatprep.subr.mxu0 0.0
        %1629 = vmatpush1.msra.mxu0 0.0
        %1630 = vmatprep.subr.mxu0 0.0
        %1631 = vmatpush1.msra.mxu0 0.0
        %1632 = vmatprep.subr.mxu0 0.0
        %1633 = vmatpush1.msra.mxu0 0.0
        %1634 = vmatprep.subr.mxu0 0.0
        %1635 = vmatpush1.msra.mxu0 0.0
        %1636 = vmatprep.subr.mxu0 0.0
        %1637 = vmatpush1.msra.mxu0 0.0
        %1638 = vmatprep.subr.mxu0 0.0
        %1639 = vmatpush1.msra.mxu0 0.0
        %1640 = vmatprep.subr.mxu0 0.0
        %1641 = vmatpush1.msra.mxu0 0.0
        %1642 = vmatprep.subr.mxu0 0.0
        %1643 = vmatpush1.msra.mxu0 0.0
        %1644 = vmatprep.subr.mxu0 0.0
        %1645 = vmatpush1.msra.mxu0 0.0
        %1646 = vmatprep.subr.mxu0 0.0
        %1647 = vmatpush1.msra.mxu0 0.0
        %1648 = vmatprep.subr.mxu0 0.0
        %1649 = vmatpush1.msra.mxu0 0.0
        %1650 = vmatprep.subr.mxu0 0.0
        %1651 = vmatpush1.msra.mxu0 0.0
        %1652 = vmatprep.subr.mxu0 0.0
        %1653 = vmatpush1.msra.mxu0 0.0
        %1654 = vmatprep.subr.mxu0 0.0
        %1655 = vmatpush1.msra.mxu0 0.0
        %1656 = vmatprep.subr.mxu0 0.0
        %1657 = vmatpush1.msra.mxu0 0.0
        %1658 = vmatprep.subr.mxu0 0.0
        %1659 = vmatpush1.msra.mxu0 0.0
        %1660 = vmatprep.subr.mxu0 0.0
        %1661 = vmatpush1.msra.mxu0 0.0
        %1662 = vmatprep.subr.mxu0 0.0
        %1663 = vmatpush1.msra.mxu0 0.0
        %1664 = vmatprep.subr.mxu0 0.0
        %1665 = vmatpush1.msra.mxu0 0.0
        %1666 = vmatprep.subr.mxu0 0.0
        %1667 = vmatpush1.msra.mxu0 0.0
        %1668 = vmatprep.subr.mxu0 0.0
        %1669 = vmatpush1.msra.mxu0 0.0
        %1670 = vmatprep.subr.mxu0 0.0
        %1671 = vmatpush1.msra.mxu0 0.0
        %1672 = vmatprep.subr.mxu0 0.0
        %1673 = vmatpush1.msra.mxu0 0.0
        %1674 = vmatprep.subr.mxu0 0.0
        %1675 = vmatpush1.msra.mxu0 0.0
        %1676 = vmatprep.subr.mxu0 0.0
        %1677 = vmatpush1.msra.mxu0 0.0
        %1678 = vmatprep.subr.mxu0 0.0
        %1679 = vmatpush1.msra.mxu0 0.0
        %1680 = vmatprep.subr.mxu0 0.0
        %1681 = vmatpush1.msra.mxu0 0.0
        %1682 = vmatprep.mubr.f32.mxu0 0.0
        %1683 = vmatmul.mubr.f32.gmra.mrb[0].mxu0 %v1613
        %v1684 = vpop.f32.mrb[0].mxu0
        %v1685 = vadd.f32 %v1585, %v1684
        %v1686 = vpop.f32.mrb[0].mxu0
        %1687 = vmatprep.mubr.f32.mxu0 0.0
        %1688 = vmatmul.mubr.f32.gmra.mrb[0].mxu0 %v1616
        %v1689 = vpop.f32.mrb[0].mxu0
        %v1690 = vadd.f32 %v1586, %v1689
        %v1691 = vpop.f32.mrb[0].mxu0
        %1692 = vdwg.mxu0
        %v1694 = vsel %vm1576, %v1591, 0
        %v1697 = vsel %vm1576, %v1592, 0
        %1699 = vmatprep.subr.mxu0 0.0
        %1700 = vmatpush1.msra.mxu0 %v1600
        %1701 = vmatprep.subr.mxu0 0.0
        %1702 = vmatpush1.msra.mxu0 0.0
        %1703 = vmatprep.subr.mxu0 0.0
        %1704 = vmatpush1.msra.mxu0 0.0
        %1705 = vmatprep.subr.mxu0 0.0
        %1706 = vmatpush1.msra.mxu0 0.0
        %1707 = vmatprep.subr.mxu0 0.0
        %1708 = vmatpush1.msra.mxu0 0.0
        %1709 = vmatprep.subr.mxu0 0.0
        %1710 = vmatpush1.msra.mxu0 0.0
        %1711 = vmatprep.subr.mxu0 0.0
        %1712 = vmatpush1.msra.mxu0 0.0
        %1713 = vmatprep.subr.mxu0 0.0
        %1714 = vmatpush1.msra.mxu0 0.0
        %1715 = vmatprep.subr.mxu0 0.0
        %1716 = vmatpush1.msra.mxu0 0.0
        %1717 = vmatprep.subr.mxu0 0.0
        %1718 = vmatpush1.msra.mxu0 0.0
        %1719 = vmatprep.subr.mxu0 0.0
        %1720 = vmatpush1.msra.mxu0 0.0
        %1721 = vmatprep.subr.mxu0 0.0
        %1722 = vmatpush1.msra.mxu0 0.0
        %1723 = vmatprep.subr.mxu0 0.0
        %1724 = vmatpush1.msra.mxu0 0.0
        %1725 = vmatprep.subr.mxu0 0.0
        %1726 = vmatpush1.msra.mxu0 0.0
        %1727 = vmatprep.subr.mxu0 0.0
        %1728 = vmatpush1.msra.mxu0 0.0
        %1729 = vmatprep.subr.mxu0 0.0
        %1730 = vmatpush1.msra.mxu0 0.0
        %1731 = vmatprep.subr.mxu0 0.0
        %1732 = vmatpush1.msra.mxu0 0.0
        %1733 = vmatprep.subr.mxu0 0.0
        %1734 = vmatpush1.msra.mxu0 0.0
        %1735 = vmatprep.subr.mxu0 0.0
        %1736 = vmatpush1.msra.mxu0 0.0
        %1737 = vmatprep.subr.mxu0 0.0
        %1738 = vmatpush1.msra.mxu0 0.0
        %1739 = vmatprep.subr.mxu0 0.0
        %1740 = vmatpush1.msra.mxu0 0.0
        %1741 = vmatprep.subr.mxu0 0.0
        %1742 = vmatpush1.msra.mxu0 0.0
        %1743 = vmatprep.subr.mxu0 0.0
        %1744 = vmatpush1.msra.mxu0 0.0
        %1745 = vmatprep.subr.mxu0 0.0
        %1746 = vmatpush1.msra.mxu0 0.0
        %1747 = vmatprep.subr.mxu0 0.0
        %1748 = vmatpush1.msra.mxu0 0.0
        %1749 = vmatprep.subr.mxu0 0.0
        %1750 = vmatpush1.msra.mxu0 0.0
        %1751 = vmatprep.subr.mxu0 0.0
        %1752 = vmatpush1.msra.mxu0 0.0
        %1753 = vmatprep.subr.mxu0 0.0
        %1754 = vmatpush1.msra.mxu0 0.0
        %1755 = vmatprep.subr.mxu0 0.0
        %1756 = vmatpush1.msra.mxu0 0.0
        %1757 = vmatprep.subr.mxu0 0.0
        %1758 = vmatpush1.msra.mxu0 0.0
        %1759 = vmatprep.subr.mxu0 0.0
        %1760 = vmatpush1.msra.mxu0 0.0
        %1761 = vmatprep.subr.mxu0 0.0
        %1762 = vmatpush1.msra.mxu0 0.0
        %1763 = vmatprep.mubr.f32.mxu0 0.0
        %1764 = vmatmul.mubr.f32.gmra.mrb[0].mxu0 %v1694
        %v1765 = vpop.f32.mrb[0].mxu0
        %v1766 = vadd.f32 %v1585, %v1765
        %v1767 = vpop.f32.mrb[0].mxu0
        %1768 = vmatprep.mubr.f32.mxu0 0.0
        %1769 = vmatmul.mubr.f32.gmra.mrb[0].mxu0 %v1697
        %v1770 = vpop.f32.mrb[0].mxu0
        %v1771 = vadd.f32 %v1586, %v1770
        %v1772 = vpop.f32.mrb[0].mxu0
        %1773 = vdwg.mxu0
        %v1775 = vsel %vm1576, %v1593, 0
        %v1778 = vsel %vm1576, %v1594, 0
        %1780 = vmatprep.subr.mxu0 0.0
        %1781 = vmatpush1.msra.mxu0 %v1601
        %1782 = vmatprep.subr.mxu0 0.0
        %1783 = vmatpush1.msra.mxu0 0.0
        %1784 = vmatprep.subr.mxu0 0.0
        %1785 = vmatpush1.msra.mxu0 0.0
        %1786 = vmatprep.subr.mxu0 0.0
        %1787 = vmatpush1.msra.mxu0 0.0
        %1788 = vmatprep.subr.mxu0 0.0
        %1789 = vmatpush1.msra.mxu0 0.0
        %1790 = vmatprep.subr.mxu0 0.0
        %1791 = vmatpush1.msra.mxu0 0.0
        %1792 = vmatprep.subr.mxu0 0.0
        %1793 = vmatpush1.msra.mxu0 0.0
        %1794 = vmatprep.subr.mxu0 0.0
        %1795 = vmatpush1.msra.mxu0 0.0
        %1796 = vmatprep.subr.mxu0 0.0
        %1797 = vmatpush1.msra.mxu0 0.0
        %1798 = vmatprep.subr.mxu0 0.0
        %1799 = vmatpush1.msra.mxu0 0.0
        %1800 = vmatprep.subr.mxu0 0.0
        %1801 = vmatpush1.msra.mxu0 0.0
        %1802 = vmatprep.subr.mxu0 0.0
        %1803 = vmatpush1.msra.mxu0 0.0
        %1804 = vmatprep.subr.mxu0 0.0
        %1805 = vmatpush1.msra.mxu0 0.0
        %1806 = vmatprep.subr.mxu0 0.0
        %1807 = vmatpush1.msra.mxu0 0.0
        %1808 = vmatprep.subr.mxu0 0.0
        %1809 = vmatpush1.msra.mxu0 0.0
        %1810 = vmatprep.subr.mxu0 0.0
        %1811 = vmatpush1.msra.mxu0 0.0
        %1812 = vmatprep.subr.mxu0 0.0
        %1813 = vmatpush1.msra.mxu0 0.0
        %1814 = vmatprep.subr.mxu0 0.0
        %1815 = vmatpush1.msra.mxu0 0.0
        %1816 = vmatprep.subr.mxu0 0.0
        %1817 = vmatpush1.msra.mxu0 0.0
        %1818 = vmatprep.subr.mxu0 0.0
        %1819 = vmatpush1.msra.mxu0 0.0
        %1820 = vmatprep.subr.mxu0 0.0
        %1821 = vmatpush1.msra.mxu0 0.0
        %1822 = vmatprep.subr.mxu0 0.0
        %1823 = vmatpush1.msra.mxu0 0.0
        %1824 = vmatprep.subr.mxu0 0.0
        %1825 = vmatpush1.msra.mxu0 0.0
        %1826 = vmatprep.subr.mxu0 0.0
        %1827 = vmatpush1.msra.mxu0 0.0
        %1828 = vmatprep.subr.mxu0 0.0
        %1829 = vmatpush1.msra.mxu0 0.0
        %1830 = vmatprep.subr.mxu0 0.0
        %1831 = vmatpush1.msra.mxu0 0.0
        %1832 = vmatprep.subr.mxu0 0.0
        %1833 = vmatpush1.msra.mxu0 0.0
        %1834 = vmatprep.subr.mxu0 0.0
        %1835 = vmatpush1.msra.mxu0 0.0
        %1836 = vmatprep.subr.mxu0 0.0
        %1837 = vmatpush1.msra.mxu0 0.0
        %1838 = vmatprep.subr.mxu0 0.0
        %1839 = vmatpush1.msra.mxu0 0.0
        %1840 = vmatprep.subr.mxu0 0.0
        %1841 = vmatpush1.msra.mxu0 0.0
        %1842 = vmatprep.subr.mxu0 0.0
        %1843 = vmatpush1.msra.mxu0 0.0
        %1844 = vmatprep.mubr.f32.mxu0 0.0
        %1845 = vmatmul.mubr.f32.gmra.mrb[0].mxu0 %v1775
        %v1846 = vpop.f32.mrb[0].mxu0
        %v1847 = vadd.f32 %v1585, %v1846
        %v1848 = vpop.f32.mrb[0].mxu0
        %1849 = vmatprep.mubr.f32.mxu0 0.0
        %1850 = vmatmul.mubr.f32.gmra.mrb[0].mxu0 %v1778
        %v1851 = vpop.f32.mrb[0].mxu0
        %v1852 = vadd.f32 %v1586, %v1851
        %v1853 = vpop.f32.mrb[0].mxu0
        %1854 = vdwg.mxu0
        %v1856 = vsel %vm1576, %v1595, 0
        %v1859 = vsel %vm1576, %v1596, 0
        %1861 = vmatprep.subr.mxu0 0.0
        %1862 = vmatpush1.msra.mxu0 %v1602
        %1863 = vmatprep.subr.mxu0 0.0
        %1864 = vmatpush1.msra.mxu0 0.0
        %1865 = vmatprep.subr.mxu0 0.0
        %1866 = vmatpush1.msra.mxu0 0.0
        %1867 = vmatprep.subr.mxu0 0.0
        %1868 = vmatpush1.msra.mxu0 0.0
        %1869 = vmatprep.subr.mxu0 0.0
        %1870 = vmatpush1.msra.mxu0 0.0
        %1871 = vmatprep.subr.mxu0 0.0
        %1872 = vmatpush1.msra.mxu0 0.0
        %1873 = vmatprep.subr.mxu0 0.0
        %1874 = vmatpush1.msra.mxu0 0.0
        %1875 = vmatprep.subr.mxu0 0.0
        %1876 = vmatpush1.msra.mxu0 0.0
        %1877 = vmatprep.subr.mxu0 0.0
        %1878 = vmatpush1.msra.mxu0 0.0
        %1879 = vmatprep.subr.mxu0 0.0
        %1880 = vmatpush1.msra.mxu0 0.0
        %1881 = vmatprep.subr.mxu0 0.0
        %1882 = vmatpush1.msra.mxu0 0.0
        %1883 = vmatprep.subr.mxu0 0.0
        %1884 = vmatpush1.msra.mxu0 0.0
        %1885 = vmatprep.subr.mxu0 0.0
        %1886 = vmatpush1.msra.mxu0 0.0
        %1887 = vmatprep.subr.mxu0 0.0
        %1888 = vmatpush1.msra.mxu0 0.0
        %1889 = vmatprep.subr.mxu0 0.0
        %1890 = vmatpush1.msra.mxu0 0.0
        %1891 = vmatprep.subr.mxu0 0.0
        %1892 = vmatpush1.msra.mxu0 0.0
        %1893 = vmatprep.subr.mxu0 0.0
        %1894 = vmatpush1.msra.mxu0 0.0
        %1895 = vmatprep.subr.mxu0 0.0
        %1896 = vmatpush1.msra.mxu0 0.0
        %1897 = vmatprep.subr.mxu0 0.0
        %1898 = vmatpush1.msra.mxu0 0.0
        %1899 = vmatprep.subr.mxu0 0.0
        %1900 = vmatpush1.msra.mxu0 0.0
        %1901 = vmatprep.subr.mxu0 0.0
        %1902 = vmatpush1.msra.mxu0 0.0
        %1903 = vmatprep.subr.mxu0 0.0
        %1904 = vmatpush1.msra.mxu0 0.0
        %1905 = vmatprep.subr.mxu0 0.0
        %1906 = vmatpush1.msra.mxu0 0.0
        %1907 = vmatprep.subr.mxu0 0.0
        %1908 = vmatpush1.msra.mxu0 0.0
        %1909 = vmatprep.subr.mxu0 0.0
        %1910 = vmatpush1.msra.mxu0 0.0
        %1911 = vmatprep.subr.mxu0 0.0
        %1912 = vmatpush1.msra.mxu0 0.0
        %1913 = vmatprep.subr.mxu0 0.0
        %1914 = vmatpush1.msra.mxu0 0.0
        %1915 = vmatprep.subr.mxu0 0.0
        %1916 = vmatpush1.msra.mxu0 0.0
        %1917 = vmatprep.subr.mxu0 0.0
        %1918 = vmatpush1.msra.mxu0 0.0
        %1919 = vmatprep.subr.mxu0 0.0
        %1920 = vmatpush1.msra.mxu0 0.0
        %1921 = vmatprep.subr.mxu0 0.0
        %1922 = vmatpush1.msra.mxu0 0.0
        %1923 = vmatprep.subr.mxu0 0.0
        %1924 = vmatpush1.msra.mxu0 0.0
        %1925 = vmatprep.mubr.f32.mxu0 0.0
        %1926 = vmatmul.mubr.f32.gmra.mrb[0].mxu0 %v1856
        %v1927 = vpop.f32.mrb[0].mxu0
        %v1928 = vadd.f32 %v1585, %v1927
        %v1929 = vpop.f32.mrb[0].mxu0
        %1930 = vmatprep.mubr.f32.mxu0 0.0
        %1931 = vmatmul.mubr.f32.gmra.mrb[0].mxu0 %v1859
        %v1932 = vpop.f32.mrb[0].mxu0
        %v1933 = vadd.f32 %v1586, %v1932
        %v1934 = vpop.f32.mrb[0].mxu0
        %1935 = vdwg.mxu0
        %vm1936 = vcmask 130048
        %v1937 = vsel %vm1936, %v1685, -inf
        %1938 = vmax.xlane.f32.xlu0 %v1937
        %v1939 = vpop.xlane.xlu0 %1938
        %v1940 = vsel %vm1936, %v1690, -inf
        %1941 = vmax.xlane.f32.xlu0 %v1940
        %v1942 = vpop.xlane.xlu0 %1941
        %v1943 = vsel %vm1936, %v1766, -inf
        %1944 = vmax.xlane.f32.xlu0 %v1943
        %v1945 = vpop.xlane.xlu0 %1944
        %v1946 = vsel %vm1936, %v1771, -inf
        %1947 = vmax.xlane.f32.xlu0 %v1946
        %v1948 = vpop.xlane.xlu0 %1947
        %v1949 = vsel %vm1936, %v1847, -inf
        %1950 = vmax.xlane.f32.xlu0 %v1949
        %v1951 = vpop.xlane.xlu0 %1950
        %v1952 = vsel %vm1936, %v1852, -inf
        %1953 = vmax.xlane.f32.xlu0 %v1952
        %v1954 = vpop.xlane.xlu0 %1953
        %v1955 = vsel %vm1936, %v1928, -inf
        %1956 = vmax.xlane.f32.xlu0 %v1955
        %v1957 = vpop.xlane.xlu0 %1956
        %v1958 = vsel %vm1936, %v1933, -inf
        %1959 = vmax.xlane.f32.xlu0 %v1958
        %v1960 = vpop.xlane.xlu0 %1959
        %v1961 = vsub.f32 %v1685, %v1939
        %v1962 = vsub.f32 %v1690, %v1942
        %v1963 = vsub.f32 %v1766, %v1945
        %v1964 = vsub.f32 %v1771, %v1948
        %v1965 = vsub.f32 %v1847, %v1951
        %v1966 = vsub.f32 %v1852, %v1954
        %v1967 = vsub.f32 %v1928, %v1957
        %v1968 = vsub.f32 %v1933, %v1960
        %v1969 = vmul.f32 %v1961, 1.442695
        %v1970 = vpow.pop %v1969
        %v1971 = vmul.f32 %v1962, 1.442695
        %v1972 = vpow.pop %v1971
        %v1973 = vmul.f32 %v1963, 1.442695
        %v1974 = vpow.pop %v1973
        %v1975 = vmul.f32 %v1964, 1.442695
        %v1976 = vpow.pop %v1975
        %v1977 = vmul.f32 %v1965, 1.442695
        %v1978 = vpow.pop %v1977
        %v1979 = vmul.f32 %v1966, 1.442695
        %v1980 = vpow.pop %v1979
        %v1981 = vmul.f32 %v1967, 1.442695
        %v1982 = vpow.pop %v1981
        %v1983 = vmul.f32 %v1968, 1.442695
        %v1984 = vpow.pop %v1983
        %v1985 = vsel %vm1936, %v1970, 0.0
        %1986 = vadd.xlane.f32.xlu0 %v1985
        %v1987 = vpop.xlane.xlu0 %1986
        %v1988 = vsel %vm1936, %v1972, 0.0
        %1989 = vadd.xlane.f32.xlu0 %v1988
        %v1990 = vpop.xlane.xlu0 %1989
        %v1991 = vsel %vm1936, %v1974, 0.0
        %1992 = vadd.xlane.f32.xlu0 %v1991
        %v1993 = vpop.xlane.xlu0 %1992
        %v1994 = vsel %vm1936, %v1976, 0.0
        %1995 = vadd.xlane.f32.xlu0 %v1994
        %v1996 = vpop.xlane.xlu0 %1995
        %v1997 = vsel %vm1936, %v1978, 0.0
        %1998 = vadd.xlane.f32.xlu0 %v1997
        %v1999 = vpop.xlane.xlu0 %1998
        %v2000 = vsel %vm1936, %v1980, 0.0
        %2001 = vadd.xlane.f32.xlu0 %v2000
        %v2002 = vpop.xlane.xlu0 %2001
        %v2003 = vsel %vm1936, %v1982, 0.0
        %2004 = vadd.xlane.f32.xlu0 %v2003
        %v2005 = vpop.xlane.xlu0 %2004
        %v2006 = vsel %vm1936, %v1984, 0.0
        %2007 = vadd.xlane.f32.xlu0 %v2006
        %v2008 = vpop.xlane.xlu0 %2007
        %v2010 = vsel %vm1936, %v1970, 0
        %v2013 = vsel %vm1936, %v1972, 0
        %2015 = vmatprep.subr.mxu0 0.0
        %2016 = vmatpush1.msra.mxu0 %v1604
        %2017 = vmatprep.subr.mxu0 0.0
        %2018 = vmatpush1.msra.mxu0 %v1605
        %2019 = vmatprep.subr.mxu0 0.0
        %2020 = vmatpush1.msra.mxu0 0.0
        %2021 = vmatprep.subr.mxu0 0.0
        %2022 = vmatpush1.msra.mxu0 0.0
        %2023 = vmatprep.subr.mxu0 0.0
        %2024 = vmatpush1.msra.mxu0 0.0
        %2025 = vmatprep.subr.mxu0 0.0
        %2026 = vmatpush1.msra.mxu0 0.0
        %2027 = vmatprep.subr.mxu0 0.0
        %2028 = vmatpush1.msra.mxu0 0.0
        %2029 = vmatprep.subr.mxu0 0.0
        %2030 = vmatpush1.msra.mxu0 0.0
        %2031 = vmatprep.subr.mxu0 0.0
        %2032 = vmatpush1.msra.mxu0 0.0
        %2033 = vmatprep.subr.mxu0 0.0
        %2034 = vmatpush1.msra.mxu0 0.0
        %2035 = vmatprep.subr.mxu0 0.0
        %2036 = vmatpush1.msra.mxu0 0.0
        %2037 = vmatprep.subr.mxu0 0.0
        %2038 = vmatpush1.msra.mxu0 0.0
        %2039 = vmatprep.subr.mxu0 0.0
        %2040 = vmatpush1.msra.mxu0 0.0
        %2041 = vmatprep.subr.mxu0 0.0
        %2042 = vmatpush1.msra.mxu0 0.0
        %2043 = vmatprep.subr.mxu0 0.0
        %2044 = vmatpush1.msra.mxu0 0.0
        %2045 = vmatprep.subr.mxu0 0.0
        %2046 = vmatpush1.msra.mxu0 0.0
        %2047 = vmatprep.subr.mxu0 0.0
        %2048 = vmatpush1.msra.mxu0 0.0
        %2049 = vmatprep.subr.mxu0 0.0
        %2050 = vmatpush1.msra.mxu0 0.0
        %2051 = vmatprep.subr.mxu0 0.0
        %2052 = vmatpush1.msra.mxu0 0.0
        %2053 = vmatprep.subr.mxu0 0.0
        %2054 = vmatpush1.msra.mxu0 0.0
        %2055 = vmatprep.subr.mxu0 0.0
        %2056 = vmatpush1.msra.mxu0 0.0
        %2057 = vmatprep.subr.mxu0 0.0
        %2058 = vmatpush1.msra.mxu0 0.0
        %2059 = vmatprep.subr.mxu0 0.0
        %2060 = vmatpush1.msra.mxu0 0.0
        %2061 = vmatprep.subr.mxu0 0.0
        %2062 = vmatpush1.msra.mxu0 0.0
        %2063 = vmatprep.subr.mxu0 0.0
        %2064 = vmatpush1.msra.mxu0 0.0
        %2065 = vmatprep.subr.mxu0 0.0
        %2066 = vmatpush1.msra.mxu0 0.0
        %2067 = vmatprep.subr.mxu0 0.0
        %2068 = vmatpush1.msra.mxu0 0.0
        %2069 = vmatprep.subr.mxu0 0.0
        %2070 = vmatpush1.msra.mxu0 0.0
        %2071 = vmatprep.subr.mxu0 0.0
        %2072 = vmatpush1.msra.mxu0 0.0
        %2073 = vmatprep.subr.mxu0 0.0
        %2074 = vmatpush1.msra.mxu0 0.0
        %2075 = vmatprep.subr.mxu0 0.0
        %2076 = vmatpush1.msra.mxu0 0.0
        %2077 = vmatprep.subr.mxu0 0.0
        %2078 = vmatpush1.msra.mxu0 0.0
        %2079 = vmatprep.mubr.f32.mxu0 0.0
        %2080 = vmatmul.mubr.f32.gmra.mrb[0].mxu0 %v2010
        %v2081 = vpop.f32.mrb[0].mxu0
        %v2082 = vadd.f32 0.0, %v2081
        %v2083 = vpop.f32.mrb[0].mxu0
        %2084 = vmatprep.mubr.f32.mxu0 0.0
        %2085 = vmatmul.mubr.f32.gmra.mrb[0].mxu0 %v2013
        %v2086 = vpop.f32.mrb[0].mxu0
        %v2087 = vadd.f32 0.0, %v2086
        %v2088 = vpop.f32.mrb[0].mxu0
        %2089 = vdwg.mxu0
        %v2091 = vsel %vm1936, %v1974, 0
        %v2094 = vsel %vm1936, %v1976, 0
        %2096 = vmatprep.subr.mxu0 0.0
        %2097 = vmatpush1.msra.mxu0 %v1606
        %2098 = vmatprep.subr.mxu0 0.0
        %2099 = vmatpush1.msra.mxu0 %v1607
        %2100 = vmatprep.subr.mxu0 0.0
        %2101 = vmatpush1.msra.mxu0 0.0
        %2102 = vmatprep.subr.mxu0 0.0
        %2103 = vmatpush1.msra.mxu0 0.0
        %2104 = vmatprep.subr.mxu0 0.0
        %2105 = vmatpush1.msra.mxu0 0.0
        %2106 = vmatprep.subr.mxu0 0.0
        %2107 = vmatpush1.msra.mxu0 0.0
        %2108 = vmatprep.subr.mxu0 0.0
        %2109 = vmatpush1.msra.mxu0 0.0
        %2110 = vmatprep.subr.mxu0 0.0
        %2111 = vmatpush1.msra.mxu0 0.0
        %2112 = vmatprep.subr.mxu0 0.0
        %2113 = vmatpush1.msra.mxu0 0.0
        %2114 = vmatprep.subr.mxu0 0.0
        %2115 = vmatpush1.msra.mxu0 0.0
        %2116 = vmatprep.subr.mxu0 0.0
        %2117 = vmatpush1.msra.mxu0 0.0
        %2118 = vmatprep.subr.mxu0 0.0
        %2119 = vmatpush1.msra.mxu0 0.0
        %2120 = vmatprep.subr.mxu0 0.0
        %2121 = vmatpush1.msra.mxu0 0.0
        %2122 = vmatprep.subr.mxu0 0.0
        %2123 = vmatpush1.msra.mxu0 0.0
        %2124 = vmatprep.subr.mxu0 0.0
        %2125 = vmatpush1.msra.mxu0 0.0
        %2126 = vmatprep.subr.mxu0 0.0
        %2127 = vmatpush1.msra.mxu0 0.0
        %2128 = vmatprep.subr.mxu0 0.0
        %2129 = vmatpush1.msra.mxu0 0.0
        %2130 = vmatprep.subr.mxu0 0.0
        %2131 = vmatpush1.msra.mxu0 0.0
        %2132 = vmatprep.subr.mxu0 0.0
        %2133 = vmatpush1.msra.mxu0 0.0
        %2134 = vmatprep.subr.mxu0 0.0
        %2135 = vmatpush1.msra.mxu0 0.0
        %2136 = vmatprep.subr.mxu0 0.0
        %2137 = vmatpush1.msra.mxu0 0.0
        %2138 = vmatprep.subr.mxu0 0.0
        %2139 = vmatpush1.msra.mxu0 0.0
        %2140 = vmatprep.subr.mxu0 0.0
        %2141 = vmatpush1.msra.mxu0 0.0
        %2142 = vmatprep.subr.mxu0 0.0
        %2143 = vmatpush1.msra.mxu0 0.0
        %2144 = vmatprep.subr.mxu0 0.0
        %2145 = vmatpush1.msra.mxu0 0.0
        %2146 = vmatprep.subr.mxu0 0.0
        %2147 = vmatpush1.msra.mxu0 0.0
        %2148 = vmatprep.subr.mxu0 0.0
        %2149 = vmatpush1.msra.mxu0 0.0
        %2150 = vmatprep.subr.mxu0 0.0
        %2151 = vmatpush1.msra.mxu0 0.0
        %2152 = vmatprep.subr.mxu0 0.0
        %2153 = vmatpush1.msra.mxu0 0.0
        %2154 = vmatprep.subr.mxu0 0.0
        %2155 = vmatpush1.msra.mxu0 0.0
        %2156 = vmatprep.subr.mxu0 0.0
        %2157 = vmatpush1.msra.mxu0 0.0
        %2158 = vmatprep.subr.mxu0 0.0
        %2159 = vmatpush1.msra.mxu0 0.0
        %2160 = vmatprep.mubr.f32.mxu0 0.0
        %2161 = vmatmul.mubr.f32.gmra.mrb[0].mxu0 %v2091
        %v2162 = vpop.f32.mrb[0].mxu0
        %v2163 = vadd.f32 0.0, %v2162
        %v2164 = vpop.f32.mrb[0].mxu0
        %2165 = vmatprep.mubr.f32.mxu0 0.0
        %2166 = vmatmul.mubr.f32.gmra.mrb[0].mxu0 %v2094
        %v2167 = vpop.f32.mrb[0].mxu0
        %v2168 = vadd.f32 0.0, %v2167
        %v2169 = vpop.f32.mrb[0].mxu0
        %2170 = vdwg.mxu0
        %v2172 = vsel %vm1936, %v1978, 0
        %v2175 = vsel %vm1936, %v1980, 0
        %2177 = vmatprep.subr.mxu0 0.0
        %2178 = vmatpush1.msra.mxu0 %v1608
        %2179 = vmatprep.subr.mxu0 0.0
        %2180 = vmatpush1.msra.mxu0 %v1609
        %2181 = vmatprep.subr.mxu0 0.0
        %2182 = vmatpush1.msra.mxu0 0.0
        %2183 = vmatprep.subr.mxu0 0.0
        %2184 = vmatpush1.msra.mxu0 0.0
        %2185 = vmatprep.subr.mxu0 0.0
        %2186 = vmatpush1.msra.mxu0 0.0
        %2187 = vmatprep.subr.mxu0 0.0
        %2188 = vmatpush1.msra.mxu0 0.0
        %2189 = vmatprep.subr.mxu0 0.0
        %2190 = vmatpush1.msra.mxu0 0.0
        %2191 = vmatprep.subr.mxu0 0.0
        %2192 = vmatpush1.msra.mxu0 0.0
        %2193 = vmatprep.subr.mxu0 0.0
        %2194 = vmatpush1.msra.mxu0 0.0
        %2195 = vmatprep.subr.mxu0 0.0
        %2196 = vmatpush1.msra.mxu0 0.0
        %2197 = vmatprep.subr.mxu0 0.0
        %2198 = vmatpush1.msra.mxu0 0.0
        %2199 = vmatprep.subr.mxu0 0.0
        %2200 = vmatpush1.msra.mxu0 0.0
        %2201 = vmatprep.subr.mxu0 0.0
        %2202 = vmatpush1.msra.mxu0 0.0
        %2203 = vmatprep.subr.mxu0 0.0
        %2204 = vmatpush1.msra.mxu0 0.0
        %2205 = vmatprep.subr.mxu0 0.0
        %2206 = vmatpush1.msra.mxu0 0.0
        %2207 = vmatprep.subr.mxu0 0.0
        %2208 = vmatpush1.msra.mxu0 0.0
        %2209 = vmatprep.subr.mxu0 0.0
        %2210 = vmatpush1.msra.mxu0 0.0
        %2211 = vmatprep.subr.mxu0 0.0
        %2212 = vmatpush1.msra.mxu0 0.0
        %2213 = vmatprep.subr.mxu0 0.0
        %2214 = vmatpush1.msra.mxu0 0.0
        %2215 = vmatprep.subr.mxu0 0.0
        %2216 = vmatpush1.msra.mxu0 0.0
        %2217 = vmatprep.subr.mxu0 0.0
        %2218 = vmatpush1.msra.mxu0 0.0
        %2219 = vmatprep.subr.mxu0 0.0
        %2220 = vmatpush1.msra.mxu0 0.0
        %2221 = vmatprep.subr.mxu0 0.0
        %2222 = vmatpush1.msra.mxu0 0.0
        %2223 = vmatprep.subr.mxu0 0.0
        %2224 = vmatpush1.msra.mxu0 0.0
        %2225 = vmatprep.subr.mxu0 0.0
        %2226 = vmatpush1.msra.mxu0 0.0
        %2227 = vmatprep.subr.mxu0 0.0
        %2228 = vmatpush1.msra.mxu0 0.0
        %2229 = vmatprep.subr.mxu0 0.0
        %2230 = vmatpush1.msra.mxu0 0.0
        %2231 = vmatprep.subr.mxu0 0.0
        %2232 = vmatpush1.msra.mxu0 0.0
        %2233 = vmatprep.subr.mxu0 0.0
        %2234 = vmatpush1.msra.mxu0 0.0
        %2235 = vmatprep.subr.mxu0 0.0
        %2236 = vmatpush1.msra.mxu0 0.0
        %2237 = vmatprep.subr.mxu0 0.0
        %2238 = vmatpush1.msra.mxu0 0.0
        %2239 = vmatprep.subr.mxu0 0.0
        %2240 = vmatpush1.msra.mxu0 0.0
        %2241 = vmatprep.mubr.f32.mxu0 0.0
        %2242 = vmatmul.mubr.f32.gmra.mrb[0].mxu0 %v2172
        %v2243 = vpop.f32.mrb[0].mxu0
        %v2244 = vadd.f32 0.0, %v2243
        %v2245 = vpop.f32.mrb[0].mxu0
        %2246 = vmatprep.mubr.f32.mxu0 0.0
        %2247 = vmatmul.mubr.f32.gmra.mrb[0].mxu0 %v2175
        %v2248 = vpop.f32.mrb[0].mxu0
        %v2249 = vadd.f32 0.0, %v2248
        %v2250 = vpop.f32.mrb[0].mxu0
        %2251 = vdwg.mxu0
        %v2253 = vsel %vm1936, %v1982, 0
        %v2256 = vsel %vm1936, %v1984, 0
        %2258 = vmatprep.subr.mxu0 0.0
        %2259 = vmatpush1.msra.mxu0 %v1610
        %2260 = vmatprep.subr.mxu0 0.0
        %2261 = vmatpush1.msra.mxu0 %v1611
        %2262 = vmatprep.subr.mxu0 0.0
        %2263 = vmatpush1.msra.mxu0 0.0
        %2264 = vmatprep.subr.mxu0 0.0
        %2265 = vmatpush1.msra.mxu0 0.0
        %2266 = vmatprep.subr.mxu0 0.0
        %2267 = vmatpush1.msra.mxu0 0.0
        %2268 = vmatprep.subr.mxu0 0.0
        %2269 = vmatpush1.msra.mxu0 0.0
        %2270 = vmatprep.subr.mxu0 0.0
        %2271 = vmatpush1.msra.mxu0 0.0
        %2272 = vmatprep.subr.mxu0 0.0
        %2273 = vmatpush1.msra.mxu0 0.0
        %2274 = vmatprep.subr.mxu0 0.0
        %2275 = vmatpush1.msra.mxu0 0.0
        %2276 = vmatprep.subr.mxu0 0.0
        %2277 = vmatpush1.msra.mxu0 0.0
        %2278 = vmatprep.subr.mxu0 0.0
        %2279 = vmatpush1.msra.mxu0 0.0
        %2280 = vmatprep.subr.mxu0 0.0
        %2281 = vmatpush1.msra.mxu0 0.0
        %2282 = vmatprep.subr.mxu0 0.0
        %2283 = vmatpush1.msra.mxu0 0.0
        %2284 = vmatprep.subr.mxu0 0.0
        %2285 = vmatpush1.msra.mxu0 0.0
        %2286 = vmatprep.subr.mxu0 0.0
        %2287 = vmatpush1.msra.mxu0 0.0
        %2288 = vmatprep.subr.mxu0 0.0
        %2289 = vmatpush1.msra.mxu0 0.0
        %2290 = vmatprep.subr.mxu0 0.0
        %2291 = vmatpush1.msra.mxu0 0.0
        %2292 = vmatprep.subr.mxu0 0.0
        %2293 = vmatpush1.msra.mxu0 0.0
        %2294 = vmatprep.subr.mxu0 0.0
        %2295 = vmatpush1.msra.mxu0 0.0
        %2296 = vmatprep.subr.mxu0 0.0
        %2297 = vmatpush1.msra.mxu0 0.0
        %2298 = vmatprep.subr.mxu0 0.0
        %2299 = vmatpush1.msra.mxu0 0.0
        %2300 = vmatprep.subr.mxu0 0.0
        %2301 = vmatpush1.msra.mxu0 0.0
        %2302 = vmatprep.subr.mxu0 0.0
        %2303 = vmatpush1.msra.mxu0 0.0
        %2304 = vmatprep.subr.mxu0 0.0
        %2305 = vmatpush1.msra.mxu0 0.0
        %2306 = vmatprep.subr.mxu0 0.0
        %2307 = vmatpush1.msra.mxu0 0.0
        %2308 = vmatprep.subr.mxu0 0.0
        %2309 = vmatpush1.msra.mxu0 0.0
        %2310 = vmatprep.subr.mxu0 0.0
        %2311 = vmatpush1.msra.mxu0 0.0
        %2312 = vmatprep.subr.mxu0 0.0
        %2313 = vmatpush1.msra.mxu0 0.0
        %2314 = vmatprep.subr.mxu0 0.0
        %2315 = vmatpush1.msra.mxu0 0.0
        %2316 = vmatprep.subr.mxu0 0.0
        %2317 = vmatpush1.msra.mxu0 0.0
        %2318 = vmatprep.subr.mxu0 0.0
        %2319 = vmatpush1.msra.mxu0 0.0
        %2320 = vmatprep.subr.mxu0 0.0
        %2321 = vmatpush1.msra.mxu0 0.0
        %2322 = vmatprep.mubr.f32.mxu0 0.0
        %2323 = vmatmul.mubr.f32.gmra.mrb[0].mxu0 %v2253
        %v2324 = vpop.f32.mrb[0].mxu0
        %v2325 = vadd.f32 0.0, %v2324
        %v2326 = vpop.f32.mrb[0].mxu0
        %2327 = vmatprep.mubr.f32.mxu0 0.0
        %2328 = vmatmul.mubr.f32.gmra.mrb[0].mxu0 %v2256
        %v2329 = vpop.f32.mrb[0].mxu0
        %v2330 = vadd.f32 0.0, %v2329
        %v2331 = vpop.f32.mrb[0].mxu0
        %2332 = vdwg.mxu0
        %v2333 = vrcp.pop %v1987
        %v2334 = vrcp.pop %v1990
        %v2335 = vrcp.pop %v1993
        %v2336 = vrcp.pop %v1996
        %v2337 = vrcp.pop %v1999
        %v2338 = vrcp.pop %v2002
        %v2339 = vrcp.pop %v2005
        %v2340 = vrcp.pop %v2008
        %v2341 = vmul.f32 %v2082, %v2333
        %v2342 = vmul.f32 %v2087, %v2334
        %v2343 = vmul.f32 %v2163, %v2335
        %v2344 = vmul.f32 %v2168, %v2336
        %v2345 = vmul.f32 %v2244, %v2337
        %v2346 = vmul.f32 %v2249, %v2338
        %v2347 = vmul.f32 %v2325, %v2339
        %v2348 = vmul.f32 %v2330, %v2340
        %s2349 = scalar_lea.vmem [#allocation5], %s1587
        %2350 = vst.msk [vmem:[%s2349] sm:$0xff] %vm1576, %v2341
        %2351 = vst.msk [vmem:[%s2349 + $0x8] sm:$0xff] %vm1576, %v2342
        %2352 = vst.msk [vmem:[%s2349 + $0x10] sm:$0xff] %vm1576, %v2343
        %2353 = vst.msk [vmem:[%s2349 + $0x18] sm:$0xff] %vm1576, %v2344
        %2354 = vst.msk [vmem:[%s2349 + $0x20] sm:$0xff] %vm1576, %v2345
        %2355 = vst.msk [vmem:[%s2349 + $0x28] sm:$0xff] %vm1576, %v2346
        %2356 = vst.msk [vmem:[%s2349 + $0x30] sm:$0xff] %vm1576, %v2347
        %2357 = vst.msk [vmem:[%s2349 + $0x38] sm:$0xff] %vm1576, %v2348
        %v2358 = vld [vmem:[#allocation5] sm:$0xff]
        %v2359 = vld [vmem:[#allocation5 + $0x8] sm:$0xff]
        %v2360 = vld [vmem:[#allocation5 + $0x10] sm:$0xff]
        %v2361 = vld [vmem:[#allocation5 + $0x18] sm:$0xff]
        %v2362 = vld [vmem:[#allocation5 + $0x20] sm:$0xff]
        %v2363 = vld [vmem:[#allocation5 + $0x28] sm:$0xff]
        %v2364 = vld [vmem:[#allocation5 + $0x30] sm:$0xff]
        %v2365 = vld [vmem:[#allocation5 + $0x38] sm:$0xff]
        %v2366 = vcombine.low %v2358, %v2362
        %v2367 = vcombine.high %v2358, %v2362
        %v2369 = vunpack.c.l.s4 1983009808
        %v2370 = vunpack.c.0.s8 %v2369
        %v2371 = vlaneseq
        %v2372 = vshrl.u32 %v2371, 7
        %v2373 = vsub.s32 %v2370, %v2372
        %v2374 = vrot.slane %v2366, %v2373
        %v2376 = vunpack.c.l.s4 1983009808
        %v2377 = vunpack.c.0.s8 %v2376
        %v2378 = vlaneseq
        %v2379 = vshrl.u32 %v2378, 7
        %v2380 = vsub.s32 %v2377, %v2379
        %v2381 = vrot.slane %v2367, %v2380
        %v2382 = vcombine.low %v2360, %v2364
        %v2383 = vcombine.high %v2360, %v2364
        %v2385 = vunpack.c.l.s4 1983009808
        %v2386 = vunpack.c.0.s8 %v2385
        %v2387 = vlaneseq
        %v2388 = vshrl.u32 %v2387, 7
        %v2389 = vsub.s32 %v2386, %v2388
        %v2390 = vrot.slane %v2382, %v2389
        %v2392 = vunpack.c.l.s4 1983009808
        %v2393 = vunpack.c.0.s8 %v2392
        %v2394 = vlaneseq
        %v2395 = vshrl.u32 %v2394, 7
        %v2396 = vsub.s32 %v2393, %v2395
        %v2397 = vrot.slane %v2383, %v2396
        %v2398 = vcombine.low %v2374, %v2390
        %v2399 = vcombine.high %v2374, %v2390
        %v2401 = vunpack.c.l.s4 1934713408
        %v2402 = vunpack.c.0.s8 %v2401
        %v2403 = vlaneseq
        %v2404 = vshrl.u32 %v2403, 7
        %v2405 = vsub.s32 %v2402, %v2404
        %v2406 = vrot.slane %v2398, %v2405
        %v2408 = vunpack.c.l.s4 1934713408
        %v2409 = vunpack.c.0.s8 %v2408
        %v2410 = vlaneseq
        %v2411 = vshrl.u32 %v2410, 7
        %v2412 = vsub.s32 %v2409, %v2411
        %v2413 = vrot.slane %v2399, %v2412
        %v2414 = vcombine.low %v2381, %v2397
        %v2415 = vcombine.high %v2381, %v2397
        %v2417 = vunpack.c.l.s4 1934713408
        %v2418 = vunpack.c.0.s8 %v2417
        %v2419 = vlaneseq
        %v2420 = vshrl.u32 %v2419, 7
        %v2421 = vsub.s32 %v2418, %v2420
        %v2422 = vrot.slane %v2414, %v2421
        %v2424 = vunpack.c.l.s4 1934713408
        %v2425 = vunpack.c.0.s8 %v2424
        %v2426 = vlaneseq
        %v2427 = vshrl.u32 %v2426, 7
        %v2428 = vsub.s32 %v2425, %v2427
        %v2429 = vrot.slane %v2415, %v2428
        %v2430 = vcombine.high %v2406, 0.0
        %v2431 = vcombine.high %v2413, 0.0
        %v2432 = vcombine.high %v2422, 0.0
        %v2433 = vcombine.high %v2429, 0.0
        %v2434 = vcombine.low %v2359, %v2363
        %v2435 = vcombine.high %v2359, %v2363
        %v2437 = vunpack.c.l.s4 1983009808
        %v2438 = vunpack.c.0.s8 %v2437
        %v2439 = vlaneseq
        %v2440 = vshrl.u32 %v2439, 7
        %v2441 = vsub.s32 %v2438, %v2440
        %v2442 = vrot.slane %v2434, %v2441
        %v2444 = vunpack.c.l.s4 1983009808
        %v2445 = vunpack.c.0.s8 %v2444
        %v2446 = vlaneseq
        %v2447 = vshrl.u32 %v2446, 7
        %v2448 = vsub.s32 %v2445, %v2447
        %v2449 = vrot.slane %v2435, %v2448
        %v2450 = vcombine.low %v2361, %v2365
        %v2451 = vcombine.high %v2361, %v2365
        %v2453 = vunpack.c.l.s4 1983009808
        %v2454 = vunpack.c.0.s8 %v2453
        %v2455 = vlaneseq
        %v2456 = vshrl.u32 %v2455, 7
        %v2457 = vsub.s32 %v2454, %v2456
        %v2458 = vrot.slane %v2450, %v2457
        %v2460 = vunpack.c.l.s4 1983009808
        %v2461 = vunpack.c.0.s8 %v2460
        %v2462 = vlaneseq
        %v2463 = vshrl.u32 %v2462, 7
        %v2464 = vsub.s32 %v2461, %v2463
        %v2465 = vrot.slane %v2451, %v2464
        %v2466 = vcombine.low %v2442, %v2458
        %v2467 = vcombine.high %v2442, %v2458
        %v2469 = vunpack.c.l.s4 1934713408
        %v2470 = vunpack.c.0.s8 %v2469
        %v2471 = vlaneseq
        %v2472 = vshrl.u32 %v2471, 7
        %v2473 = vsub.s32 %v2470, %v2472
        %v2474 = vrot.slane %v2466, %v2473
        %v2476 = vunpack.c.l.s4 1934713408
        %v2477 = vunpack.c.0.s8 %v2476
        %v2478 = vlaneseq
        %v2479 = vshrl.u32 %v2478, 7
        %v2480 = vsub.s32 %v2477, %v2479
        %v2481 = vrot.slane %v2467, %v2480
        %v2482 = vcombine.low %v2449, %v2465
        %v2483 = vcombine.high %v2449, %v2465
        %v2485 = vunpack.c.l.s4 1934713408
        %v2486 = vunpack.c.0.s8 %v2485
        %v2487 = vlaneseq
        %v2488 = vshrl.u32 %v2487, 7
        %v2489 = vsub.s32 %v2486, %v2488
        %v2490 = vrot.slane %v2482, %v2489
        %v2492 = vunpack.c.l.s4 1934713408
        %v2493 = vunpack.c.0.s8 %v2492
        %v2494 = vlaneseq
        %v2495 = vshrl.u32 %v2494, 7
        %v2496 = vsub.s32 %v2493, %v2495
        %v2497 = vrot.slane %v2483, %v2496
        %v2498 = vcombine.high %v2474, 0.0
        %v2499 = vcombine.high %v2481, 0.0
        %v2500 = vcombine.high %v2490, 0.0
        %v2501 = vcombine.high %v2497, 0.0
        %v2502 = vcombine.low %v2406, %v2413
        %v2504 = vunpack.c.l.s4 1983009808
        %v2505 = vunpack.c.0.s8 %v2504
        %v2506 = vlaneseq
        %v2507 = vshrl.u32 %v2506, 7
        %v2508 = vsub.s32 %v2505, %v2507
        %v2509 = vrot.slane %v2502, %v2508
        %v2510 = vcombine.low %v2430, %v2431
        %v2512 = vunpack.c.l.s4 1983009808
        %v2513 = vunpack.c.0.s8 %v2512
        %v2514 = vlaneseq
        %v2515 = vshrl.u32 %v2514, 7
        %v2516 = vsub.s32 %v2513, %v2515
        %v2517 = vrot.slane %v2510, %v2516
        %v2518 = vcombine.low %v2422, %v2429
        %v2520 = vunpack.c.l.s4 1983009808
        %v2521 = vunpack.c.0.s8 %v2520
        %v2522 = vlaneseq
        %v2523 = vshrl.u32 %v2522, 7
        %v2524 = vsub.s32 %v2521, %v2523
        %v2525 = vrot.slane %v2518, %v2524
        %v2526 = vcombine.low %v2432, %v2433
        %v2528 = vunpack.c.l.s4 1983009808
        %v2529 = vunpack.c.0.s8 %v2528
        %v2530 = vlaneseq
        %v2531 = vshrl.u32 %v2530, 7
        %v2532 = vsub.s32 %v2529, %v2531
        %v2533 = vrot.slane %v2526, %v2532
        %v2534 = vcombine.low %v2509, %v2517
        %v2535 = vcombine.high %v2509, %v2517
        %v2537 = vunpack.c.l.s4 1934713408
        %v2538 = vunpack.c.0.s8 %v2537
        %v2539 = vlaneseq
        %v2540 = vshrl.u32 %v2539, 7
        %v2541 = vsub.s32 %v2538, %v2540
        %v2542 = vrot.slane %v2534, %v2541
        %v2544 = vunpack.c.l.s4 1934713408
        %v2545 = vunpack.c.0.s8 %v2544
        %v2546 = vlaneseq
        %v2547 = vshrl.u32 %v2546, 7
        %v2548 = vsub.s32 %v2545, %v2547
        %v2549 = vrot.slane %v2535, %v2548
        %v2550 = vcombine.low %v2525, %v2533
        %v2551 = vcombine.high %v2525, %v2533
        %v2553 = vunpack.c.l.s4 1934713408
        %v2554 = vunpack.c.0.s8 %v2553
        %v2555 = vlaneseq
        %v2556 = vshrl.u32 %v2555, 7
        %v2557 = vsub.s32 %v2554, %v2556
        %v2558 = vrot.slane %v2550, %v2557
        %v2560 = vunpack.c.l.s4 1934713408
        %v2561 = vunpack.c.0.s8 %v2560
        %v2562 = vlaneseq
        %v2563 = vshrl.u32 %v2562, 7
        %v2564 = vsub.s32 %v2561, %v2563
        %v2565 = vrot.slane %v2551, %v2564
        %v2566 = vcombine.low %v2542, %v2558
        %v2567 = vcombine.high %v2542, %v2558
        %v2568 = vcombine.low %v2549, %v2565
        %v2569 = vcombine.high %v2549, %v2565
        %v2570 = vcombine.low %v2474, %v2481
        %v2572 = vunpack.c.l.s4 1983009808
        %v2573 = vunpack.c.0.s8 %v2572
        %v2574 = vlaneseq
        %v2575 = vshrl.u32 %v2574, 7
        %v2576 = vsub.s32 %v2573, %v2575
        %v2577 = vrot.slane %v2570, %v2576
        %v2578 = vcombine.low %v2498, %v2499
        %v2580 = vunpack.c.l.s4 1983009808
        %v2581 = vunpack.c.0.s8 %v2580
        %v2582 = vlaneseq
        %v2583 = vshrl.u32 %v2582, 7
        %v2584 = vsub.s32 %v2581, %v2583
        %v2585 = vrot.slane %v2578, %v2584
        %v2586 = vcombine.low %v2490, %v2497
        %v2588 = vunpack.c.l.s4 1983009808
        %v2589 = vunpack.c.0.s8 %v2588
        %v2590 = vlaneseq
        %v2591 = vshrl.u32 %v2590, 7
        %v2592 = vsub.s32 %v2589, %v2591
        %v2593 = vrot.slane %v2586, %v2592
        %v2594 = vcombine.low %v2500, %v2501
        %v2596 = vunpack.c.l.s4 1983009808
        %v2597 = vunpack.c.0.s8 %v2596
        %v2598 = vlaneseq
        %v2599 = vshrl.u32 %v2598, 7
        %v2600 = vsub.s32 %v2597, %v2599
        %v2601 = vrot.slane %v2594, %v2600
        %v2602 = vcombine.low %v2577, %v2585
        %v2603 = vcombine.high %v2577, %v2585
        %v2605 = vunpack.c.l.s4 1934713408
        %v2606 = vunpack.c.0.s8 %v2605
        %v2607 = vlaneseq
        %v2608 = vshrl.u32 %v2607, 7
        %v2609 = vsub.s32 %v2606, %v2608
        %v2610 = vrot.slane %v2602, %v2609
        %v2612 = vunpack.c.l.s4 1934713408
        %v2613 = vunpack.c.0.s8 %v2612
        %v2614 = vlaneseq
        %v2615 = vshrl.u32 %v2614, 7
        %v2616 = vsub.s32 %v2613, %v2615
        %v2617 = vrot.slane %v2603, %v2616
        %v2618 = vcombine.low %v2593, %v2601
        %v2619 = vcombine.high %v2593, %v2601
        %v2621 = vunpack.c.l.s4 1934713408
        %v2622 = vunpack.c.0.s8 %v2621
        %v2623 = vlaneseq
        %v2624 = vshrl.u32 %v2623, 7
        %v2625 = vsub.s32 %v2622, %v2624
        %v2626 = vrot.slane %v2618, %v2625
        %v2628 = vunpack.c.l.s4 1934713408
        %v2629 = vunpack.c.0.s8 %v2628
        %v2630 = vlaneseq
        %v2631 = vshrl.u32 %v2630, 7
        %v2632 = vsub.s32 %v2629, %v2631
        %v2633 = vrot.slane %v2619, %v2632
        %v2634 = vcombine.low %v2610, %v2626
        %v2635 = vcombine.high %v2610, %v2626
        %v2636 = vcombine.low %v2617, %v2633
        %v2637 = vcombine.high %v2617, %v2633
        %2640 = vrot.lane.b32.xlu0 %v2567, 8
        %v2641 = vpop.permute.xlu0 %2640
        %2642 = vrot.lane.b32.xlu0 %v2635, 8
        %v2643 = vpop.permute.xlu0 %2642
        %2648 = vrot.lane.b32.xlu0 %v2568, 16
        %v2649 = vpop.permute.xlu0 %2648
        %2650 = vrot.lane.b32.xlu0 %v2636, 16
        %v2651 = vpop.permute.xlu0 %2650
        %2656 = vrot.lane.b32.xlu0 %v2569, 24
        %v2657 = vpop.permute.xlu0 %2656
        %2658 = vrot.lane.b32.xlu0 %v2637, 24
        %v2659 = vpop.permute.xlu0 %2658
        %v2662 = vsel %vm1576, %v2566, %v2641
        %v2663 = vsel %vm1576, %v2634, %v2643
        %v2664 = vsel %vm1936, %v2662, %v2649
        %v2665 = vsel %vm1936, %v2663, %v2651
        %vm2666 = vcmask 195584
        %v2667 = vsel %vm2666, %v2664, %v2657
        %v2668 = vsel %vm2666, %v2665, %v2659
        %v2669 = vld [vmem:[#allocation23] sm:$0xff]
        %v2670 = vld [vmem:[#allocation23 + $0x8] sm:$0xff]
        %v2671 = vld [vmem:[#allocation23 + $0x10] sm:$0xff]
        %v2672 = vld [vmem:[#allocation23 + $0x18] sm:$0xff]
        %v2673 = vld [vmem:[#allocation24] sm:$0x1]
        %v2675 = vlaneseq
        %v2676 = vshrl.u32 %v2675, 7
        %v2677 = vsub.s32 0, %v2676
        %v2678 = vrot.slane %v2673, %v2677
        %v2681 = vsel %vm1200, %v2667, 0
        %v2684 = vsel %vm1200, %v2668, 0
        %2686 = vmatprep.subr.mxu0 0.0
        %2687 = vmatpush1.msra.mxu0 %v2669
        %2688 = vmatprep.subr.mxu0 0.0
        %2689 = vmatpush1.msra.mxu0 %v2670
        %2690 = vmatprep.subr.mxu0 0.0
        %2691 = vmatpush1.msra.mxu0 %v2671
        %2692 = vmatprep.subr.mxu0 0.0
        %2693 = vmatpush1.msra.mxu0 %v2672
        %2694 = vmatprep.subr.mxu0 0.0
        %2695 = vmatpush1.msra.mxu0 0.0
        %2696 = vmatprep.subr.mxu0 0.0
        %2697 = vmatpush1.msra.mxu0 0.0
        %2698 = vmatprep.subr.mxu0 0.0
        %2699 = vmatpush1.msra.mxu0 0.0
        %2700 = vmatprep.subr.mxu0 0.0
        %2701 = vmatpush1.msra.mxu0 0.0
        %2702 = vmatprep.subr.mxu0 0.0
        %2703 = vmatpush1.msra.mxu0 0.0
        %2704 = vmatprep.subr.mxu0 0.0
        %2705 = vmatpush1.msra.mxu0 0.0
        %2706 = vmatprep.subr.mxu0 0.0
        %2707 = vmatpush1.msra.mxu0 0.0
        %2708 = vmatprep.subr.mxu0 0.0
        %2709 = vmatpush1.msra.mxu0 0.0
        %2710 = vmatprep.subr.mxu0 0.0
        %2711 = vmatpush1.msra.mxu0 0.0
        %2712 = vmatprep.subr.mxu0 0.0
        %2713 = vmatpush1.msra.mxu0 0.0
        %2714 = vmatprep.subr.mxu0 0.0
        %2715 = vmatpush1.msra.mxu0 0.0
        %2716 = vmatprep.subr.mxu0 0.0
        %2717 = vmatpush1.msra.mxu0 0.0
        %2718 = vmatprep.subr.mxu0 0.0
        %2719 = vmatpush1.msra.mxu0 0.0
        %2720 = vmatprep.subr.mxu0 0.0
        %2721 = vmatpush1.msra.mxu0 0.0
        %2722 = vmatprep.subr.mxu0 0.0
        %2723 = vmatpush1.msra.mxu0 0.0
        %2724 = vmatprep.subr.mxu0 0.0
        %2725 = vmatpush1.msra.mxu0 0.0
        %2726 = vmatprep.subr.mxu0 0.0
        %2727 = vmatpush1.msra.mxu0 0.0
        %2728 = vmatprep.subr.mxu0 0.0
        %2729 = vmatpush1.msra.mxu0 0.0
        %2730 = vmatprep.subr.mxu0 0.0
        %2731 = vmatpush1.msra.mxu0 0.0
        %2732 = vmatprep.subr.mxu0 0.0
        %2733 = vmatpush1.msra.mxu0 0.0
        %2734 = vmatprep.subr.mxu0 0.0
        %2735 = vmatpush1.msra.mxu0 0.0
        %2736 = vmatprep.subr.mxu0 0.0
        %2737 = vmatpush1.msra.mxu0 0.0
        %2738 = vmatprep.subr.mxu0 0.0
        %2739 = vmatpush1.msra.mxu0 0.0
        %2740 = vmatprep.subr.mxu0 0.0
        %2741 = vmatpush1.msra.mxu0 0.0
        %2742 = vmatprep.subr.mxu0 0.0
        %2743 = vmatpush1.msra.mxu0 0.0
        %2744 = vmatprep.subr.mxu0 0.0
        %2745 = vmatpush1.msra.mxu0 0.0
        %2746 = vmatprep.subr.mxu0 0.0
        %2747 = vmatpush1.msra.mxu0 0.0
        %2748 = vmatprep.subr.mxu0 0.0
        %2749 = vmatpush1.msra.mxu0 0.0
        %2750 = vmatprep.mubr.f32.mxu0 0.0
        %2751 = vmatmul.mubr.f32.gmra.mrb[0].mxu0 %v2681
        %v2752 = vpop.f32.mrb[0].mxu0
        %v2753 = vadd.f32 %v2678, %v2752
        %v2754 = vpop.f32.mrb[0].mxu0
        %2755 = vmatprep.mubr.f32.mxu0 0.0
        %2756 = vmatmul.mubr.f32.gmra.mrb[0].mxu0 %v2684
        %v2757 = vpop.f32.mrb[0].mxu0
        %v2758 = vadd.f32 %v2678, %v2757
        %v2759 = vpop.f32.mrb[0].mxu0
        %2760 = vdwg.mxu0
        %2761 = vst.msk [vmem:[%s651] sm:$0xff] %vm1200, %v2753
        %2762 = vst.msk [vmem:[%s651 + $0x8] sm:$0xff] %vm1200, %v2758
        %s2763 = sand.u32 %s330, 1
        %s2764 = scalar_lea.sflag [#allocation8], %s2763
        %s2765 = sand.u32 %s330, 1
        %s2766 = smul.addr %s2765, 16
        %s2767 = scalar_lea.vmem [#allocation26], %s2766
        // Predicated region
        $region121: #{tpu_custom_call.1} parent=67 // pred_check
          %p2768 = pneg %p340
        $region122: #{tpu_custom_call.1} parent=67 // pred_check_branch
          %2770 = sbr.rel (%p2768) target = $region124
        $region123: #{tpu_custom_call.1} parent=67 // pred_region
          %s2771 = smul.u32 2, %s42
          %s2773 = ssub.s32 256, 256
          %2774 = vsyncadd %s2764, %s2773
          %s2775 = smul.addr %s41, 2
          %s2776 = sadd.s32 %s2771, %s2775
          %s2777 = smul.addr %s2776, 128
          %s2778 = scalar_lea.hbm %s12, %s2777
          %s2779 = sshll.u32 %s2767, 4
          %s2780 = int_to_ptr.vmem [resolvable:$true] %s2779
          %2785 = dma.vmem_to_hbm [thread:$0]  %s2780, 256, %s2778, %s2764, 128, 128, 8
        $region124: #{tpu_custom_call.1} parent=67 // pred_fallthru
          _
      $region68: #{tpu_custom_call.1} parent=5 // pred_fallthru
        _
      %p2786 = scmp.le.s32.totalorder 2, %s32
      // Predicated region
      $region125: #{tpu_custom_call.1} parent=5 // pred_check
        %p2787 = pneg %p2786
      $region126: #{tpu_custom_call.1} parent=5 // pred_check_branch
        %2789 = sbr.rel (%p2787) target = $region128
      $region127: #{tpu_custom_call.1} parent=5 // pred_region
        %s2790 = ssub.s32 %s32, 2
        // Predicated region
        $region129: #{tpu_custom_call.1} parent=127 // pred_check
          %p2791 = pneg %p346
        $region130: #{tpu_custom_call.1} parent=127 // pred_check_branch
          %2793 = sbr.rel (%p2791) target = $region132
        $region131: #{tpu_custom_call.1} parent=127 // pred_region
          %s2794 = sand.u32 %s331, 1
          %s2795 = scalar_lea.sflag [#allocation8], %s2794
          %s2796 = sand.u32 %s331, 1
          %s2797 = smul.addr %s2796, 16
          %s2798 = scalar_lea.vmem [#allocation26], %s2797
          %2799 = dma.done %s2795, 256
        $region132: #{tpu_custom_call.1} parent=127 // pred_fallthru
          _
      $region128: #{tpu_custom_call.1} parent=5 // pred_fallthru
        _
    $region6: #{tpu_custom_call.1} parent=1 // loop_footer
      %s36 = sadd.s32 1, %s32
    $region7: #{tpu_custom_call.1} parent=1 // loop_footer_branch
      %31 = sbr.rel target = $region3
    $region8: #{tpu_custom_call.1} parent=1 // loop_exit
      _
    %2800 = vsyncpa [#allocation7], 1
    %s2801 = scalar_lea.sflag [#allocation7], 1
    %2802 = vsyncpa %s2801, 1
    %2803 = vsyncpa [#allocation10], 1
    %s2804 = scalar_lea.sflag [#allocation10], 1
    %2805 = vsyncpa %s2804, 1
    %2806 = vsyncpa [#allocation13], 1
    %2807 = vsyncpa [#allocation16], 1
    %2808 = vsyncpa [#allocation19], 1
    %2809 = vsyncpa [#allocation22], 1
    %2810 = vsyncpa [#allocation25], 1
    %2811 = vsyncpa [#allocation8], 1
    %s2812 = scalar_lea.sflag [#allocation8], 1
    %2813 = vsyncpa %s2812, 1

</llo_original>
